<compile_context>
chip_gen: v7x
topology: tpu7x:2x2x1
jax: 0.10.0
libtpu: 0.0.40
codegen_flags: <defaults>
</compile_context>

<pallas_src>
import functools

import jax
import jax.numpy as jnp
import numpy as np
from jax.experimental import pallas as pl
from jax.experimental.pallas import tpu as pltpu


# ----------------------------------------------------------------------------
# Parameter / buffer construction (init-time, numpy, deterministic)
# ----------------------------------------------------------------------------
def _fspecial_gauss_1d(size, sigma):
    coords = np.arange(size, dtype=np.float32) - (size // 2)
    g = np.exp(-(coords ** 2) / (2.0 * sigma ** 2))
    return (g / g.sum()).astype(np.float32)


def _band_matrix(g, n):
    """B (n-k+1, n) with B[i, i+j] = g[j]; B @ v == 'valid' correlation."""
    size = g.shape[0]
    nout = n - size + 1
    b = np.zeros((nout, n), np.float32)
    for i in range(nout):
        b[i, i:i + size] = g
    return b


def make_masked_ssim_buffers(not_valid_mask, H, W, win_size=11, win_sigma=1.5):
    """Reproduces MaskedSSIM.__init__: 1-D gauss taps, band matrices and the
    precomputed_valid_mask of shape (H-win+1, W-win+1)."""
    # TODO(synk): the reference skips the blur along any dim < win_size
    # (with a warning); that path is not implemented here.
    assert H >= win_size and W >= win_size
    g = _fspecial_gauss_1d(win_size, win_sigma)
    gh = _band_matrix(g, H)                         # (Ho, H)
    gw = _band_matrix(g, W)                         # (Wo, W)
    nv = np.asarray(not_valid_mask, np.float32)
    # Nonnegative weights: exact zeros are preserved, matching (blur == 0.0).
    blurred_not_valid = gh @ nv @ gw.T
    valid_mask = (blurred_not_valid == 0.0).astype(np.float32)
    return g, jnp.asarray(gh), jnp.asarray(gw), jnp.asarray(valid_mask)


def _choose_layout(nc, w, lane_cap=2048):
    """Returns (images_per_step B, per-image padded lane width Wpad) with
    (B*Wpad) % 128 == 0. Prefers >= 2 grid steps so both v7x TensorCores get
    work; if no divisor of nc keeps tiles lane-dense at the native W, the
    per-image lane width is padded to the next multiple of 128."""
    aligned = [b for b in range(1, nc + 1)
               if nc % b == 0 and (b * w) % 128 == 0 and b * w <= lane_cap]
    if aligned:
        multi = [b for b in aligned if nc // b >= 2]
        return (max(multi) if multi else max(aligned)), w
    wpad = ((w + 127) // 128) * 128
    multi = [b for b in range(1, nc + 1)
             if nc % b == 0 and nc // b >= 2 and b * wpad <= lane_cap]
    return (max(multi) if multi else 1), wpad


# ----------------------------------------------------------------------------
# Pallas kernel: 11-tap VPU H-blur, per-image MXU W-blur, SSIM map,
# masked lane-dense per-step partial sums (grid axis fully parallel).
# ----------------------------------------------------------------------------
def _masked_ssim_kernel(x_ref, y_ref, wblur_ref, mask_ref, out_ref, *,
                        g_taps, ho, c1, c2):
    x = x_ref[...]                                  # (H, B*Wpad) lane-dense f32
    y = y_ref[...]
    wblur = wblur_ref[...]                          # (B*Wpad, LG) const
    mask = mask_ref[...]                            # (Ho, LG) const

    def blur(v):
        # H direction: 11-tap shifted-FMA over static sublane slices (VPU,
        # no structural-zero MXU FLOPs, no GH band matrix in VMEM).
        acc = g_taps[0] * v[0:ho, :]
        for k in range(1, len(g_taps)):
            acc = acc + g_taps[k] * v[k:k + ho, :]
        # W direction: per-image block-diagonal blur, one small MXU matmul
        # with the SAME shared weight for every channel group.
        return jnp.dot(acc, wblur, preferred_element_type=jnp.float32)

    mu1 = blur(x)
    mu2 = blur(y)
    ex2 = blur(x * x)
    ey2 = blur(y * y)
    exy = blur(x * y)

    mu1_sq = mu1 * mu1
    mu2_sq = mu2 * mu2
    mu1_mu2 = mu1 * mu2
    sigma1_sq = ex2 - mu1_sq          # cancellation-sensitive: keep f32
    sigma2_sq = ey2 - mu2_sq
    sigma12 = exy - mu1_mu2

    num = (2.0 * mu1_mu2 + c1) * (2.0 * sigma12 + c2)
    den = (mu1_sq + mu2_sq + c1) * (sigma1_sq + sigma2_sq + c2)

    # EUP approximate reciprocal + one Newton step (error ~ eps^2): overlaps
    # the VPU SSIM math instead of spending VALU cycles on an exact divide.
    r = pl.reciprocal(den, approx=True)
    r = r * (2.0 - den * r)
    ssim_map = num * r

    masked = mask * ssim_map                        # padded lanes: mask == 0
    # Lane-dense per-step partial sums; no serial cross-step accumulator.
    out_ref[...] = jnp.sum(masked, axis=0, keepdims=True).reshape(1, 1, -1)


def masked_ssim_pallas(X, Y, g, gw, valid_mask, data_range=255.0,
                       K=(0.01, 0.03)):
    """X, Y: (N, C, H, W); returns the scalar masked-SSIM mean."""
    N, C, H, W = X.shape
    Ho, Wo = valid_mask.shape
    NC = N * C
    win = int(g.shape[0])
    assert Ho == H - win + 1 and Wo == W - win + 1

    B, Wpad = _choose_layout(NC, W)                 # images / step, lane pad
    NB = NC // B
    BWp = B * Wpad
    LG = ((B * Wo + 127) // 128) * 128              # 128-aligned output lanes

    # Lane-dense layout (H, NC*Wpad); image j occupies lanes [j*Wpad, j*Wpad+W).
    # TODO(synk): fold this transpose into the producer / cache across calls.
    def relayout(T):
        t = T.astype(jnp.float32).reshape(NC, H, W)
        if Wpad != W:
            t = jnp.pad(t, ((0, 0), (0, 0), (0, Wpad - W)))
        return t.transpose(1, 0, 2).reshape(H, NC * Wpad)

    Xp = relayout(X)
    Yp = relayout(Y)

    # ONE shared per-image block-diagonal W-blur weight (no 5x kron) and the
    # lane-tiled valid mask; padded lanes are all-zero in both.
    gwT = np.asarray(gw).T                          # (W, Wo)
    wblur = np.zeros((BWp, LG), np.float32)
    maskL = np.zeros((Ho, LG), np.float32)
    vm = np.asarray(valid_mask, np.float32)
    for b in range(B):
        wblur[b * Wpad:b * Wpad + W, b * Wo:(b + 1) * Wo] = gwT
        maskL[:, b * Wo:(b + 1) * Wo] = vm
    wblur = jnp.asarray(wblur)
    maskL = jnp.asarray(maskL)

    c1 = float((K[0] * data_range) ** 2)
    c2 = float((K[1] * data_range) ** 2)
    kernel = functools.partial(_masked_ssim_kernel,
                               g_taps=tuple(float(t) for t in g),
                               ho=Ho, c1=c1, c2=c2)

    # VMEM budget from the actual block shapes: x/y double-buffered, constants
    # single-buffered, ~10 live temps, plus generous headroom.
    f32 = 4
    est = (2 * 2 * H * BWp + (BWp * LG + Ho * LG) + 2 * LG
           + 6 * H * BWp + 12 * Ho * LG) * f32
    vmem_limit = int(min(max(2 * est, 32 * 1024 * 1024), 112 * 1024 * 1024))

    def run(single_buffer_consts):
        def const_spec(shape):
            if single_buffer_consts:
                return pl.BlockSpec(shape, lambda i: (0,) * len(shape),
                                    pipeline_mode=pl.Buffered(1))
            return pl.BlockSpec(shape, lambda i: (0,) * len(shape))

        return pl.pallas_call(
            kernel,
            out_shape=jax.ShapeDtypeStruct((NB, 1, LG), jnp.float32),
            grid_spec=pltpu.PrefetchScalarGridSpec(
                num_scalar_prefetch=0,
                grid=(NB,),
                in_specs=[
                    pl.BlockSpec((H, BWp), lambda i: (0, i)),
                    pl.BlockSpec((H, BWp), lambda i: (0, i)),
                    const_spec((BWp, LG)),
                    const_spec((Ho, LG)),
                ],
                out_specs=pl.BlockSpec((1, 1, LG), lambda i: (i, 0, 0)),
            ),
            compiler_params=pltpu.CompilerParams(
                dimension_semantics=("parallel",),
                vmem_limit_bytes=vmem_limit),
        )(Xp, Yp, wblur, maskL)

    if hasattr(pl, "Buffered"):
        try:
            partial_sums = run(True)
        except Exception:
            # pipeline_mode / Buffered(1) unsupported in this build: fall back.
            partial_sums = run(False)
    else:
        partial_sums = run(False)

    # Normalization hoisted out of the kernel.
    n_valid = jnp.sum(valid_mask)
    return jnp.sum(partial_sums) / (n_valid * float(NC))


# ----------------------------------------------------------------------------
# Pure-JAX reference (same math; HIGHEST precision so it is truly f32)
# ----------------------------------------------------------------------------
def masked_ssim_ref(X, Y, gh, gw, valid_mask, data_range=255.0, K=(0.01, 0.03)):
    c1 = (K[0] * data_range) ** 2
    c2 = (K[1] * data_range) ** 2
    hp = jax.lax.Precision.HIGHEST
    Xf = X.astype(jnp.float32)
    Yf = Y.astype(jnp.float32)

    def blur(t):  # (N,C,H,W) -> (N,C,Ho,Wo)
        return jnp.einsum('ph,nchw,qw->ncpq', gh, t, gw, precision=hp)

    mu1, mu2 = blur(Xf), blur(Yf)
    s1 = blur(Xf * Xf) - mu1 * mu1
    s2 = blur(Yf * Yf) - mu2 * mu2
    s12 = blur(Xf * Yf) - mu1 * mu2
    cs_map = (2 * s12 + c2) / (s1 + s2 + c2)
    ssim_map = (2 * mu1 * mu2 + c1) / (mu1 * mu1 + mu2 * mu2 + c1) * cs_map
    n_valid = jnp.sum(valid_mask)
    ssim_pc = jnp.sum(valid_mask[None, None] * ssim_map, axis=(-2, -1)) / n_valid
    return jnp.mean(ssim_pc)


# ----------------------------------------------------------------------------
if __name__ == "__main__":
    N, C, H, W = 2, 4, 16, 16
    WIN_SIZE, WIN_SIGMA = 11, 1.5
    DATA_RANGE = 255.0

    key = jax.random.PRNGKey(0)
    kx, ky = jax.random.split(key)
    X = jax.random.uniform(kx, (N, C, H, W), jnp.float32) * DATA_RANGE
    Y = jax.random.uniform(ky, (N, C, H, W), jnp.float32) * DATA_RANGE

    # deterministic not_valid_mask: a 2x2 invalid block in the top-left corner
    not_valid_mask = np.zeros((H, W), np.float32)
    not_valid_mask[:2, :2] = 1.0

    g, gh, gw, valid_mask = make_masked_ssim_buffers(
        not_valid_mask, H, W, win_size=WIN_SIZE, win_sigma=WIN_SIGMA)

    result = masked_ssim_pallas(X, Y, g, gw, valid_mask,
                                data_range=DATA_RANGE, K=(0.01, 0.03))
    result = jax.block_until_ready(result)

    ref = masked_ssim_ref(X, Y, gh, gw, valid_mask,
                          data_range=DATA_RANGE, K=(0.01, 0.03))
    ref = jax.block_until_ready(ref)

    assert jnp.allclose(result, ref, rtol=1e-4, atol=1e-5), (result, ref)
    print("KERNEL_OK")
</pallas_src>

<mosaic_0001>
module attributes {stable_mosaic.version = 11 : i64} {
  func.func @_masked_ssim_kernel(%arg0: i32, %arg1: memref<16x128xf32, #tpu.memory_space<vmem>>, %arg2: memref<16x128xf32, #tpu.memory_space<vmem>>, %arg3: memref<128x128xf32, #tpu.memory_space<vmem>>, %arg4: memref<6x128xf32, #tpu.memory_space<vmem>>, %arg5: memref<1x1x128xf32, #tpu.memory_space<vmem>>) attributes {dimension_semantics = [#tpu.dimension_semantics<parallel>], iteration_bounds = array<i64: 1>, scalar_prefetch = 0 : i64, scratch_operands = 0 : i64, tpu.core_type = #tpu.core_type<tc>, window_params = [{transform_indices = @transform_0, window_bounds = array<i64: 16, 128>}, {transform_indices = @transform_1, window_bounds = array<i64: 16, 128>}, {pipeline_mode = #tpu.pipeline_mode<synchronous>, transform_indices = @transform_2, window_bounds = array<i64: 128, 128>}, {pipeline_mode = #tpu.pipeline_mode<synchronous>, transform_indices = @transform_3, window_bounds = array<i64: 6, 128>}, {transform_indices = @transform_4, window_bounds = array<i64: 1, 1, 128>}]} {
    %c0 = arith.constant 0 : index
    %c0_0 = arith.constant 0 : index
    %0 = vector.load %arg1[%c0, %c0_0] : memref<16x128xf32, #tpu.memory_space<vmem>>, vector<16x128xf32>
    %c0_1 = arith.constant 0 : index
    %c0_2 = arith.constant 0 : index
    %1 = vector.load %arg2[%c0_1, %c0_2] : memref<16x128xf32, #tpu.memory_space<vmem>>, vector<16x128xf32>
    %c0_3 = arith.constant 0 : index
    %c0_4 = arith.constant 0 : index
    %2 = vector.load %arg3[%c0_3, %c0_4] : memref<128x128xf32, #tpu.memory_space<vmem>>, vector<128x128xf32>
    %c0_5 = arith.constant 0 : index
    %c0_6 = arith.constant 0 : index
    %3 = vector.load %arg4[%c0_5, %c0_6] : memref<6x128xf32, #tpu.memory_space<vmem>>, vector<6x128xf32>
    %4 = vector.extract_strided_slice %0 {offsets = [0, 0], sizes = [6, 128], strides = [1, 1]} : vector<16x128xf32> to vector<6x128xf32>
    %cst = arith.constant 0.00102838036 : f32
    %5 = vector.broadcast %cst : f32 to vector<6x128xf32>
    %6 = arith.mulf %5, %4 : vector<6x128xf32>
    %7 = vector.extract_strided_slice %0 {offsets = [1, 0], sizes = [6, 128], strides = [1, 1]} : vector<16x128xf32> to vector<6x128xf32>
    %cst_7 = arith.constant 0.00759875868 : f32
    %8 = vector.broadcast %cst_7 : f32 to vector<6x128xf32>
    %9 = arith.mulf %8, %7 : vector<6x128xf32>
    %10 = arith.addf %6, %9 : vector<6x128xf32>
    %11 = vector.extract_strided_slice %0 {offsets = [2, 0], sizes = [6, 128], strides = [1, 1]} : vector<16x128xf32> to vector<6x128xf32>
    %cst_8 = arith.constant 0.0360007733 : f32
    %12 = vector.broadcast %cst_8 : f32 to vector<6x128xf32>
    %13 = arith.mulf %12, %11 : vector<6x128xf32>
    %14 = arith.addf %10, %13 : vector<6x128xf32>
    %15 = vector.extract_strided_slice %0 {offsets = [3, 0], sizes = [6, 128], strides = [1, 1]} : vector<16x128xf32> to vector<6x128xf32>
    %cst_9 = arith.constant 0.109360702 : f32
    %16 = vector.broadcast %cst_9 : f32 to vector<6x128xf32>
    %17 = arith.mulf %16, %15 : vector<6x128xf32>
    %18 = arith.addf %14, %17 : vector<6x128xf32>
    %19 = vector.extract_strided_slice %0 {offsets = [4, 0], sizes = [6, 128], strides = [1, 1]} : vector<16x128xf32> to vector<6x128xf32>
    %cst_10 = arith.constant 0.213005543 : f32
    %20 = vector.broadcast %cst_10 : f32 to vector<6x128xf32>
    %21 = arith.mulf %20, %19 : vector<6x128xf32>
    %22 = arith.addf %18, %21 : vector<6x128xf32>
    %23 = vector.extract_strided_slice %0 {offsets = [5, 0], sizes = [6, 128], strides = [1, 1]} : vector<16x128xf32> to vector<6x128xf32>
    %cst_11 = arith.constant 0.266011745 : f32
    %24 = vector.broadcast %cst_11 : f32 to vector<6x128xf32>
    %25 = arith.mulf %24, %23 : vector<6x128xf32>
    %26 = arith.addf %22, %25 : vector<6x128xf32>
    %27 = vector.extract_strided_slice %0 {offsets = [6, 0], sizes = [6, 128], strides = [1, 1]} : vector<16x128xf32> to vector<6x128xf32>
    %cst_12 = arith.constant 0.213005543 : f32
    %28 = vector.broadcast %cst_12 : f32 to vector<6x128xf32>
    %29 = arith.mulf %28, %27 : vector<6x128xf32>
    %30 = arith.addf %26, %29 : vector<6x128xf32>
    %31 = vector.extract_strided_slice %0 {offsets = [7, 0], sizes = [6, 128], strides = [1, 1]} : vector<16x128xf32> to vector<6x128xf32>
    %cst_13 = arith.constant 0.109360702 : f32
    %32 = vector.broadcast %cst_13 : f32 to vector<6x128xf32>
    %33 = arith.mulf %32, %31 : vector<6x128xf32>
    %34 = arith.addf %30, %33 : vector<6x128xf32>
    %35 = vector.extract_strided_slice %0 {offsets = [8, 0], sizes = [6, 128], strides = [1, 1]} : vector<16x128xf32> to vector<6x128xf32>
    %cst_14 = arith.constant 0.0360007733 : f32
    %36 = vector.broadcast %cst_14 : f32 to vector<6x128xf32>
    %37 = arith.mulf %36, %35 : vector<6x128xf32>
    %38 = arith.addf %34, %37 : vector<6x128xf32>
    %39 = vector.extract_strided_slice %0 {offsets = [9, 0], sizes = [6, 128], strides = [1, 1]} : vector<16x128xf32> to vector<6x128xf32>
    %cst_15 = arith.constant 0.00759875868 : f32
    %40 = vector.broadcast %cst_15 : f32 to vector<6x128xf32>
    %41 = arith.mulf %40, %39 : vector<6x128xf32>
    %42 = arith.addf %38, %41 : vector<6x128xf32>
    %43 = vector.extract_strided_slice %0 {offsets = [10, 0], sizes = [6, 128], strides = [1, 1]} : vector<16x128xf32> to vector<6x128xf32>
    %cst_16 = arith.constant 0.00102838036 : f32
    %44 = vector.broadcast %cst_16 : f32 to vector<6x128xf32>
    %45 = arith.mulf %44, %43 : vector<6x128xf32>
    %46 = arith.addf %42, %45 : vector<6x128xf32>
    %cst_17 = arith.constant dense<0.000000e+00> : vector<6x128xf32>
    %47 = tpu.matmul %46, %2, %cst_17 {dimension_numbers = #tpu.dot_dimension_numbers<[1], [0], [0], [1], [0, 0, 1, 1], [], []>} : vector<6x128xf32>, vector<128x128xf32>, vector<6x128xf32> -> vector<6x128xf32>
    %48 = vector.extract_strided_slice %1 {offsets = [0, 0], sizes = [6, 128], strides = [1, 1]} : vector<16x128xf32> to vector<6x128xf32>
    %cst_18 = arith.constant 0.00102838036 : f32
    %49 = vector.broadcast %cst_18 : f32 to vector<6x128xf32>
    %50 = arith.mulf %49, %48 : vector<6x128xf32>
    %51 = vector.extract_strided_slice %1 {offsets = [1, 0], sizes = [6, 128], strides = [1, 1]} : vector<16x128xf32> to vector<6x128xf32>
    %cst_19 = arith.constant 0.00759875868 : f32
    %52 = vector.broadcast %cst_19 : f32 to vector<6x128xf32>
    %53 = arith.mulf %52, %51 : vector<6x128xf32>
    %54 = arith.addf %50, %53 : vector<6x128xf32>
    %55 = vector.extract_strided_slice %1 {offsets = [2, 0], sizes = [6, 128], strides = [1, 1]} : vector<16x128xf32> to vector<6x128xf32>
    %cst_20 = arith.constant 0.0360007733 : f32
    %56 = vector.broadcast %cst_20 : f32 to vector<6x128xf32>
    %57 = arith.mulf %56, %55 : vector<6x128xf32>
    %58 = arith.addf %54, %57 : vector<6x128xf32>
    %59 = vector.extract_strided_slice %1 {offsets = [3, 0], sizes = [6, 128], strides = [1, 1]} : vector<16x128xf32> to vector<6x128xf32>
    %cst_21 = arith.constant 0.109360702 : f32
    %60 = vector.broadcast %cst_21 : f32 to vector<6x128xf32>
    %61 = arith.mulf %60, %59 : vector<6x128xf32>
    %62 = arith.addf %58, %61 : vector<6x128xf32>
    %63 = vector.extract_strided_slice %1 {offsets = [4, 0], sizes = [6, 128], strides = [1, 1]} : vector<16x128xf32> to vector<6x128xf32>
    %cst_22 = arith.constant 0.213005543 : f32
    %64 = vector.broadcast %cst_22 : f32 to vector<6x128xf32>
    %65 = arith.mulf %64, %63 : vector<6x128xf32>
    %66 = arith.addf %62, %65 : vector<6x128xf32>
    %67 = vector.extract_strided_slice %1 {offsets = [5, 0], sizes = [6, 128], strides = [1, 1]} : vector<16x128xf32> to vector<6x128xf32>
    %cst_23 = arith.constant 0.266011745 : f32
    %68 = vector.broadcast %cst_23 : f32 to vector<6x128xf32>
    %69 = arith.mulf %68, %67 : vector<6x128xf32>
    %70 = arith.addf %66, %69 : vector<6x128xf32>
    %71 = vector.extract_strided_slice %1 {offsets = [6, 0], sizes = [6, 128], strides = [1, 1]} : vector<16x128xf32> to vector<6x128xf32>
    %cst_24 = arith.constant 0.213005543 : f32
    %72 = vector.broadcast %cst_24 : f32 to vector<6x128xf32>
    %73 = arith.mulf %72, %71 : vector<6x128xf32>
    %74 = arith.addf %70, %73 : vector<6x128xf32>
    %75 = vector.extract_strided_slice %1 {offsets = [7, 0], sizes = [6, 128], strides = [1, 1]} : vector<16x128xf32> to vector<6x128xf32>
    %cst_25 = arith.constant 0.109360702 : f32
    %76 = vector.broadcast %cst_25 : f32 to vector<6x128xf32>
    %77 = arith.mulf %76, %75 : vector<6x128xf32>
    %78 = arith.addf %74, %77 : vector<6x128xf32>
    %79 = vector.extract_strided_slice %1 {offsets = [8, 0], sizes = [6, 128], strides = [1, 1]} : vector<16x128xf32> to vector<6x128xf32>
    %cst_26 = arith.constant 0.0360007733 : f32
    %80 = vector.broadcast %cst_26 : f32 to vector<6x128xf32>
    %81 = arith.mulf %80, %79 : vector<6x128xf32>
    %82 = arith.addf %78, %81 : vector<6x128xf32>
    %83 = vector.extract_strided_slice %1 {offsets = [9, 0], sizes = [6, 128], strides = [1, 1]} : vector<16x128xf32> to vector<6x128xf32>
    %cst_27 = arith.constant 0.00759875868 : f32
    %84 = vector.broadcast %cst_27 : f32 to vector<6x128xf32>
    %85 = arith.mulf %84, %83 : vector<6x128xf32>
    %86 = arith.addf %82, %85 : vector<6x128xf32>
    %87 = vector.extract_strided_slice %1 {offsets = [10, 0], sizes = [6, 128], strides = [1, 1]} : vector<16x128xf32> to vector<6x128xf32>
    %cst_28 = arith.constant 0.00102838036 : f32
    %88 = vector.broadcast %cst_28 : f32 to vector<6x128xf32>
    %89 = arith.mulf %88, %87 : vector<6x128xf32>
    %90 = arith.addf %86, %89 : vector<6x128xf32>
    %cst_29 = arith.constant dense<0.000000e+00> : vector<6x128xf32>
    %91 = tpu.matmul %90, %2, %cst_29 {dimension_numbers = #tpu.dot_dimension_numbers<[1], [0], [0], [1], [0, 0, 1, 1], [], []>} : vector<6x128xf32>, vector<128x128xf32>, vector<6x128xf32> -> vector<6x128xf32>
    %92 = arith.mulf %0, %0 : vector<16x128xf32>
    %93 = vector.extract_strided_slice %92 {offsets = [0, 0], sizes = [6, 128], strides = [1, 1]} : vector<16x128xf32> to vector<6x128xf32>
    %cst_30 = arith.constant 0.00102838036 : f32
    %94 = vector.broadcast %cst_30 : f32 to vector<6x128xf32>
    %95 = arith.mulf %94, %93 : vector<6x128xf32>
    %96 = vector.extract_strided_slice %92 {offsets = [1, 0], sizes = [6, 128], strides = [1, 1]} : vector<16x128xf32> to vector<6x128xf32>
    %cst_31 = arith.constant 0.00759875868 : f32
    %97 = vector.broadcast %cst_31 : f32 to vector<6x128xf32>
    %98 = arith.mulf %97, %96 : vector<6x128xf32>
    %99 = arith.addf %95, %98 : vector<6x128xf32>
    %100 = vector.extract_strided_slice %92 {offsets = [2, 0], sizes = [6, 128], strides = [1, 1]} : vector<16x128xf32> to vector<6x128xf32>
    %cst_32 = arith.constant 0.0360007733 : f32
    %101 = vector.broadcast %cst_32 : f32 to vector<6x128xf32>
    %102 = arith.mulf %101, %100 : vector<6x128xf32>
    %103 = arith.addf %99, %102 : vector<6x128xf32>
    %104 = vector.extract_strided_slice %92 {offsets = [3, 0], sizes = [6, 128], strides = [1, 1]} : vector<16x128xf32> to vector<6x128xf32>
    %cst_33 = arith.constant 0.109360702 : f32
    %105 = vector.broadcast %cst_33 : f32 to vector<6x128xf32>
    %106 = arith.mulf %105, %104 : vector<6x128xf32>
    %107 = arith.addf %103, %106 : vector<6x128xf32>
    %108 = vector.extract_strided_slice %92 {offsets = [4, 0], sizes = [6, 128], strides = [1, 1]} : vector<16x128xf32> to vector<6x128xf32>
    %cst_34 = arith.constant 0.213005543 : f32
    %109 = vector.broadcast %cst_34 : f32 to vector<6x128xf32>
    %110 = arith.mulf %109, %108 : vector<6x128xf32>
    %111 = arith.addf %107, %110 : vector<6x128xf32>
    %112 = vector.extract_strided_slice %92 {offsets = [5, 0], sizes = [6, 128], strides = [1, 1]} : vector<16x128xf32> to vector<6x128xf32>
    %cst_35 = arith.constant 0.266011745 : f32
    %113 = vector.broadcast %cst_35 : f32 to vector<6x128xf32>
    %114 = arith.mulf %113, %112 : vector<6x128xf32>
    %115 = arith.addf %111, %114 : vector<6x128xf32>
    %116 = vector.extract_strided_slice %92 {offsets = [6, 0], sizes = [6, 128], strides = [1, 1]} : vector<16x128xf32> to vector<6x128xf32>
    %cst_36 = arith.constant 0.213005543 : f32
    %117 = vector.broadcast %cst_36 : f32 to vector<6x128xf32>
    %118 = arith.mulf %117, %116 : vector<6x128xf32>
    %119 = arith.addf %115, %118 : vector<6x128xf32>
    %120 = vector.extract_strided_slice %92 {offsets = [7, 0], sizes = [6, 128], strides = [1, 1]} : vector<16x128xf32> to vector<6x128xf32>
    %cst_37 = arith.constant 0.109360702 : f32
    %121 = vector.broadcast %cst_37 : f32 to vector<6x128xf32>
    %122 = arith.mulf %121, %120 : vector<6x128xf32>
    %123 = arith.addf %119, %122 : vector<6x128xf32>
    %124 = vector.extract_strided_slice %92 {offsets = [8, 0], sizes = [6, 128], strides = [1, 1]} : vector<16x128xf32> to vector<6x128xf32>
    %cst_38 = arith.constant 0.0360007733 : f32
    %125 = vector.broadcast %cst_38 : f32 to vector<6x128xf32>
    %126 = arith.mulf %125, %124 : vector<6x128xf32>
    %127 = arith.addf %123, %126 : vector<6x128xf32>
    %128 = vector.extract_strided_slice %92 {offsets = [9, 0], sizes = [6, 128], strides = [1, 1]} : vector<16x128xf32> to vector<6x128xf32>
    %cst_39 = arith.constant 0.00759875868 : f32
    %129 = vector.broadcast %cst_39 : f32 to vector<6x128xf32>
    %130 = arith.mulf %129, %128 : vector<6x128xf32>
    %131 = arith.addf %127, %130 : vector<6x128xf32>
    %132 = vector.extract_strided_slice %92 {offsets = [10, 0], sizes = [6, 128], strides = [1, 1]} : vector<16x128xf32> to vector<6x128xf32>
    %cst_40 = arith.constant 0.00102838036 : f32
    %133 = vector.broadcast %cst_40 : f32 to vector<6x128xf32>
    %134 = arith.mulf %133, %132 : vector<6x128xf32>
    %135 = arith.addf %131, %134 : vector<6x128xf32>
    %cst_41 = arith.constant dense<0.000000e+00> : vector<6x128xf32>
    %136 = tpu.matmul %135, %2, %cst_41 {dimension_numbers = #tpu.dot_dimension_numbers<[1], [0], [0], [1], [0, 0, 1, 1], [], []>} : vector<6x128xf32>, vector<128x128xf32>, vector<6x128xf32> -> vector<6x128xf32>
    %137 = arith.mulf %1, %1 : vector<16x128xf32>
    %138 = vector.extract_strided_slice %137 {offsets = [0, 0], sizes = [6, 128], strides = [1, 1]} : vector<16x128xf32> to vector<6x128xf32>
    %cst_42 = arith.constant 0.00102838036 : f32
    %139 = vector.broadcast %cst_42 : f32 to vector<6x128xf32>
    %140 = arith.mulf %139, %138 : vector<6x128xf32>
    %141 = vector.extract_strided_slice %137 {offsets = [1, 0], sizes = [6, 128], strides = [1, 1]} : vector<16x128xf32> to vector<6x128xf32>
    %cst_43 = arith.constant 0.00759875868 : f32
    %142 = vector.broadcast %cst_43 : f32 to vector<6x128xf32>
    %143 = arith.mulf %142, %141 : vector<6x128xf32>
    %144 = arith.addf %140, %143 : vector<6x128xf32>
    %145 = vector.extract_strided_slice %137 {offsets = [2, 0], sizes = [6, 128], strides = [1, 1]} : vector<16x128xf32> to vector<6x128xf32>
    %cst_44 = arith.constant 0.0360007733 : f32
    %146 = vector.broadcast %cst_44 : f32 to vector<6x128xf32>
    %147 = arith.mulf %146, %145 : vector<6x128xf32>
    %148 = arith.addf %144, %147 : vector<6x128xf32>
    %149 = vector.extract_strided_slice %137 {offsets = [3, 0], sizes = [6, 128], strides = [1, 1]} : vector<16x128xf32> to vector<6x128xf32>
    %cst_45 = arith.constant 0.109360702 : f32
    %150 = vector.broadcast %cst_45 : f32 to vector<6x128xf32>
    %151 = arith.mulf %150, %149 : vector<6x128xf32>
    %152 = arith.addf %148, %151 : vector<6x128xf32>
    %153 = vector.extract_strided_slice %137 {offsets = [4, 0], sizes = [6, 128], strides = [1, 1]} : vector<16x128xf32> to vector<6x128xf32>
    %cst_46 = arith.constant 0.213005543 : f32
    %154 = vector.broadcast %cst_46 : f32 to vector<6x128xf32>
    %155 = arith.mulf %154, %153 : vector<6x128xf32>
    %156 = arith.addf %152, %155 : vector<6x128xf32>
    %157 = vector.extract_strided_slice %137 {offsets = [5, 0], sizes = [6, 128], strides = [1, 1]} : vector<16x128xf32> to vector<6x128xf32>
    %cst_47 = arith.constant 0.266011745 : f32
    %158 = vector.broadcast %cst_47 : f32 to vector<6x128xf32>
    %159 = arith.mulf %158, %157 : vector<6x128xf32>
    %160 = arith.addf %156, %159 : vector<6x128xf32>
    %161 = vector.extract_strided_slice %137 {offsets = [6, 0], sizes = [6, 128], strides = [1, 1]} : vector<16x128xf32> to vector<6x128xf32>
    %cst_48 = arith.constant 0.213005543 : f32
    %162 = vector.broadcast %cst_48 : f32 to vector<6x128xf32>
    %163 = arith.mulf %162, %161 : vector<6x128xf32>
    %164 = arith.addf %160, %163 : vector<6x128xf32>
    %165 = vector.extract_strided_slice %137 {offsets = [7, 0], sizes = [6, 128], strides = [1, 1]} : vector<16x128xf32> to vector<6x128xf32>
    %cst_49 = arith.constant 0.109360702 : f32
    %166 = vector.broadcast %cst_49 : f32 to vector<6x128xf32>
    %167 = arith.mulf %166, %165 : vector<6x128xf32>
    %168 = arith.addf %164, %167 : vector<6x128xf32>
    %169 = vector.extract_strided_slice %137 {offsets = [8, 0], sizes = [6, 128], strides = [1, 1]} : vector<16x128xf32> to vector<6x128xf32>
    %cst_50 = arith.constant 0.0360007733 : f32
    %170 = vector.broadcast %cst_50 : f32 to vector<6x128xf32>
    %171 = arith.mulf %170, %169 : vector<6x128xf32>
    %172 = arith.addf %168, %171 : vector<6x128xf32>
    %173 = vector.extract_strided_slice %137 {offsets = [9, 0], sizes = [6, 128], strides = [1, 1]} : vector<16x128xf32> to vector<6x128xf32>
    %cst_51 = arith.constant 0.00759875868 : f32
    %174 = vector.broadcast %cst_51 : f32 to vector<6x128xf32>
    %175 = arith.mulf %174, %173 : vector<6x128xf32>
    %176 = arith.addf %172, %175 : vector<6x128xf32>
    %177 = vector.extract_strided_slice %137 {offsets = [10, 0], sizes = [6, 128], strides = [1, 1]} : vector<16x128xf32> to vector<6x128xf32>
    %cst_52 = arith.constant 0.00102838036 : f32
    %178 = vector.broadcast %cst_52 : f32 to vector<6x128xf32>
    %179 = arith.mulf %178, %177 : vector<6x128xf32>
    %180 = arith.addf %176, %179 : vector<6x128xf32>
    %cst_53 = arith.constant dense<0.000000e+00> : vector<6x128xf32>
    %181 = tpu.matmul %180, %2, %cst_53 {dimension_numbers = #tpu.dot_dimension_numbers<[1], [0], [0], [1], [0, 0, 1, 1], [], []>} : vector<6x128xf32>, vector<128x128xf32>, vector<6x128xf32> -> vector<6x128xf32>
    %182 = arith.mulf %0, %1 : vector<16x128xf32>
    %183 = vector.extract_strided_slice %182 {offsets = [0, 0], sizes = [6, 128], strides = [1, 1]} : vector<16x128xf32> to vector<6x128xf32>
    %cst_54 = arith.constant 0.00102838036 : f32
    %184 = vector.broadcast %cst_54 : f32 to vector<6x128xf32>
    %185 = arith.mulf %184, %183 : vector<6x128xf32>
    %186 = vector.extract_strided_slice %182 {offsets = [1, 0], sizes = [6, 128], strides = [1, 1]} : vector<16x128xf32> to vector<6x128xf32>
    %cst_55 = arith.constant 0.00759875868 : f32
    %187 = vector.broadcast %cst_55 : f32 to vector<6x128xf32>
    %188 = arith.mulf %187, %186 : vector<6x128xf32>
    %189 = arith.addf %185, %188 : vector<6x128xf32>
    %190 = vector.extract_strided_slice %182 {offsets = [2, 0], sizes = [6, 128], strides = [1, 1]} : vector<16x128xf32> to vector<6x128xf32>
    %cst_56 = arith.constant 0.0360007733 : f32
    %191 = vector.broadcast %cst_56 : f32 to vector<6x128xf32>
    %192 = arith.mulf %191, %190 : vector<6x128xf32>
    %193 = arith.addf %189, %192 : vector<6x128xf32>
    %194 = vector.extract_strided_slice %182 {offsets = [3, 0], sizes = [6, 128], strides = [1, 1]} : vector<16x128xf32> to vector<6x128xf32>
    %cst_57 = arith.constant 0.109360702 : f32
    %195 = vector.broadcast %cst_57 : f32 to vector<6x128xf32>
    %196 = arith.mulf %195, %194 : vector<6x128xf32>
    %197 = arith.addf %193, %196 : vector<6x128xf32>
    %198 = vector.extract_strided_slice %182 {offsets = [4, 0], sizes = [6, 128], strides = [1, 1]} : vector<16x128xf32> to vector<6x128xf32>
    %cst_58 = arith.constant 0.213005543 : f32
    %199 = vector.broadcast %cst_58 : f32 to vector<6x128xf32>
    %200 = arith.mulf %199, %198 : vector<6x128xf32>
    %201 = arith.addf %197, %200 : vector<6x128xf32>
    %202 = vector.extract_strided_slice %182 {offsets = [5, 0], sizes = [6, 128], strides = [1, 1]} : vector<16x128xf32> to vector<6x128xf32>
    %cst_59 = arith.constant 0.266011745 : f32
    %203 = vector.broadcast %cst_59 : f32 to vector<6x128xf32>
    %204 = arith.mulf %203, %202 : vector<6x128xf32>
    %205 = arith.addf %201, %204 : vector<6x128xf32>
    %206 = vector.extract_strided_slice %182 {offsets = [6, 0], sizes = [6, 128], strides = [1, 1]} : vector<16x128xf32> to vector<6x128xf32>
    %cst_60 = arith.constant 0.213005543 : f32
    %207 = vector.broadcast %cst_60 : f32 to vector<6x128xf32>
    %208 = arith.mulf %207, %206 : vector<6x128xf32>
    %209 = arith.addf %205, %208 : vector<6x128xf32>
    %210 = vector.extract_strided_slice %182 {offsets = [7, 0], sizes = [6, 128], strides = [1, 1]} : vector<16x128xf32> to vector<6x128xf32>
    %cst_61 = arith.constant 0.109360702 : f32
    %211 = vector.broadcast %cst_61 : f32 to vector<6x128xf32>
    %212 = arith.mulf %211, %210 : vector<6x128xf32>
    %213 = arith.addf %209, %212 : vector<6x128xf32>
    %214 = vector.extract_strided_slice %182 {offsets = [8, 0], sizes = [6, 128], strides = [1, 1]} : vector<16x128xf32> to vector<6x128xf32>
    %cst_62 = arith.constant 0.0360007733 : f32
    %215 = vector.broadcast %cst_62 : f32 to vector<6x128xf32>
    %216 = arith.mulf %215, %214 : vector<6x128xf32>
    %217 = arith.addf %213, %216 : vector<6x128xf32>
    %218 = vector.extract_strided_slice %182 {offsets = [9, 0], sizes = [6, 128], strides = [1, 1]} : vector<16x128xf32> to vector<6x128xf32>
    %cst_63 = arith.constant 0.00759875868 : f32
    %219 = vector.broadcast %cst_63 : f32 to vector<6x128xf32>
    %220 = arith.mulf %219, %218 : vector<6x128xf32>
    %221 = arith.addf %217, %220 : vector<6x128xf32>
    %222 = vector.extract_strided_slice %182 {offsets = [10, 0], sizes = [6, 128], strides = [1, 1]} : vector<16x128xf32> to vector<6x128xf32>
    %cst_64 = arith.constant 0.00102838036 : f32
    %223 = vector.broadcast %cst_64 : f32 to vector<6x128xf32>
    %224 = arith.mulf %223, %222 : vector<6x128xf32>
    %225 = arith.addf %221, %224 : vector<6x128xf32>
    %cst_65 = arith.constant dense<0.000000e+00> : vector<6x128xf32>
    %226 = tpu.matmul %225, %2, %cst_65 {dimension_numbers = #tpu.dot_dimension_numbers<[1], [0], [0], [1], [0, 0, 1, 1], [], []>} : vector<6x128xf32>, vector<128x128xf32>, vector<6x128xf32> -> vector<6x128xf32>
    %227 = arith.mulf %47, %47 : vector<6x128xf32>
    %228 = arith.mulf %91, %91 : vector<6x128xf32>
    %229 = arith.mulf %47, %91 : vector<6x128xf32>
    %230 = arith.subf %136, %227 : vector<6x128xf32>
    %231 = arith.subf %181, %228 : vector<6x128xf32>
    %232 = arith.subf %226, %229 : vector<6x128xf32>
    %cst_66 = arith.constant 2.000000e+00 : f32
    %233 = vector.broadcast %cst_66 : f32 to vector<6x128xf32>
    %234 = arith.mulf %233, %229 : vector<6x128xf32>
    %cst_67 = arith.constant 6.502500e+00 : f32
    %235 = vector.broadcast %cst_67 : f32 to vector<6x128xf32>
    %236 = arith.addf %234, %235 : vector<6x128xf32>
    %cst_68 = arith.constant 2.000000e+00 : f32
    %237 = vector.broadcast %cst_68 : f32 to vector<6x128xf32>
    %238 = arith.mulf %237, %232 : vector<6x128xf32>
    %cst_69 = arith.constant 5.852250e+01 : f32
    %239 = vector.broadcast %cst_69 : f32 to vector<6x128xf32>
    %240 = arith.addf %238, %239 : vector<6x128xf32>
    %241 = arith.mulf %236, %240 : vector<6x128xf32>
    %242 = arith.addf %227, %228 : vector<6x128xf32>
    %cst_70 = arith.constant 6.502500e+00 : f32
    %243 = vector.broadcast %cst_70 : f32 to vector<6x128xf32>
    %244 = arith.addf %242, %243 : vector<6x128xf32>
    %245 = arith.addf %230, %231 : vector<6x128xf32>
    %cst_71 = arith.constant 5.852250e+01 : f32
    %246 = vector.broadcast %cst_71 : f32 to vector<6x128xf32>
    %247 = arith.addf %245, %246 : vector<6x128xf32>
    %248 = arith.mulf %244, %247 : vector<6x128xf32>
    %249 = tpu.reciprocal %248 {approx = true} : vector<6x128xf32> -> vector<6x128xf32>
    %250 = arith.mulf %248, %249 : vector<6x128xf32>
    %cst_72 = arith.constant 2.000000e+00 : f32
    %251 = vector.broadcast %cst_72 : f32 to vector<6x128xf32>
    %252 = arith.subf %251, %250 : vector<6x128xf32>
    %253 = arith.mulf %249, %252 : vector<6x128xf32>
    %254 = arith.mulf %241, %253 : vector<6x128xf32>
    %255 = arith.mulf %3, %254 : vector<6x128xf32>
    %cst_73 = arith.constant dense<0.000000e+00> : vector<128xf32>
    %256 = vector.multi_reduction <add>, %255, %cst_73 [0] : vector<6x128xf32> to vector<128xf32>
    %257 = vector.shape_cast %256 : vector<128xf32> to vector<1x128xf32>
    %258 = vector.shape_cast %257 : vector<1x128xf32> to vector<1x1x128xf32>
    %c0_74 = arith.constant 0 : index
    %c0_75 = arith.constant 0 : index
    %c0_76 = arith.constant 0 : index
    %259 = vector.load %arg5[%c0_74, %c0_75, %c0_76] : memref<1x1x128xf32, #tpu.memory_space<vmem>>, vector<1x1x128xf32>
    tpu.vector_store %arg5[%c0_74, %c0_75, %c0_76], %258 {strides = array<i32>} : memref<1x1x128xf32, #tpu.memory_space<vmem>>, vector<1x1x128xf32>,
    return
  }
  func.func @transform_0(%arg0: i32) -> (i32, i32) {
    %c0_i32 = arith.constant 0 : i32
    %c0_i32_0 = arith.constant 0 : i32
    return %c0_i32, %arg0 : i32, i32
  }
  func.func @transform_1(%arg0: i32) -> (i32, i32) {
    %c0_i32 = arith.constant 0 : i32
    %c0_i32_0 = arith.constant 0 : i32
    return %c0_i32, %arg0 : i32, i32
  }
  func.func @transform_2(%arg0: i32) -> (i32, i32) {
    %c0_i32 = arith.constant 0 : i32
    %c0_i32_0 = arith.constant 0 : i32
    %c0_i32_1 = arith.constant 0 : i32
    return %c0_i32, %c0_i32_0 : i32, i32
  }
  func.func @transform_3(%arg0: i32) -> (i32, i32) {
    %c0_i32 = arith.constant 0 : i32
    %c0_i32_0 = arith.constant 0 : i32
    %c0_i32_1 = arith.constant 0 : i32
    return %c0_i32, %c0_i32_0 : i32, i32
  }
  func.func @transform_4(%arg0: i32) -> (i32, i32, i32) {
    %c0_i32 = arith.constant 0 : i32
    %c0_i32_0 = arith.constant 0 : i32
    %c0_i32_1 = arith.constant 0 : i32
    return %arg0, %c0_i32, %c0_i32_0 : i32, i32, i32
  }
}

module attributes {stable_mosaic.version = 11 : i64} {
  func.func @_masked_ssim_kernel(%arg0: i32, %arg1: memref<16x128xf32, #tpu.memory_space<vmem>>, %arg2: memref<16x128xf32, #tpu.memory_space<vmem>>, %arg3: memref<128x128xf32, #tpu.memory_space<vmem>>, %arg4: memref<6x128xf32, #tpu.memory_space<vmem>>, %arg5: memref<1x1x128xf32, #tpu.memory_space<vmem>>) attributes {dimension_semantics = [#tpu.dimension_semantics<parallel>], iteration_bounds = array<i64: 1>, scalar_prefetch = 0 : i64, scratch_operands = 0 : i64, tpu.core_type = #tpu.core_type<tc>, window_params = [{transform_indices = @transform_0, window_bounds = array<i64: 16, 128>}, {transform_indices = @transform_1, window_bounds = array<i64: 16, 128>}, {pipeline_mode = #tpu.pipeline_mode<synchronous>, transform_indices = @transform_2, window_bounds = array<i64: 128, 128>}, {pipeline_mode = #tpu.pipeline_mode<synchronous>, transform_indices = @transform_3, window_bounds = array<i64: 6, 128>}, {transform_indices = @transform_4, window_bounds = array<i64: 1, 1, 128>}]} {
    %c0 = arith.constant 0 : index
    %c0_0 = arith.constant 0 : index
    %0 = vector.load %arg1[%c0, %c0_0] : memref<16x128xf32, #tpu.memory_space<vmem>>, vector<16x128xf32>
    %c0_1 = arith.constant 0 : index
    %c0_2 = arith.constant 0 : index
    %1 = vector.load %arg2[%c0_1, %c0_2] : memref<16x128xf32, #tpu.memory_space<vmem>>, vector<16x128xf32>
    %c0_3 = arith.constant 0 : index
    %c0_4 = arith.constant 0 : index
    %2 = vector.load %arg3[%c0_3, %c0_4] : memref<128x128xf32, #tpu.memory_space<vmem>>, vector<128x128xf32>
    %c0_5 = arith.constant 0 : index
    %c0_6 = arith.constant 0 : index
    %3 = vector.load %arg4[%c0_5, %c0_6] : memref<6x128xf32, #tpu.memory_space<vmem>>, vector<6x128xf32>
    %4 = vector.extract_strided_slice %0 {offsets = [0, 0], sizes = [6, 128], strides = [1, 1]} : vector<16x128xf32> to vector<6x128xf32>
    %cst = arith.constant 0.00102838036 : f32
    %5 = vector.broadcast %cst : f32 to vector<6x128xf32>
    %6 = arith.mulf %5, %4 : vector<6x128xf32>
    %7 = vector.extract_strided_slice %0 {offsets = [1, 0], sizes = [6, 128], strides = [1, 1]} : vector<16x128xf32> to vector<6x128xf32>
    %cst_7 = arith.constant 0.00759875868 : f32
    %8 = vector.broadcast %cst_7 : f32 to vector<6x128xf32>
    %9 = arith.mulf %8, %7 : vector<6x128xf32>
    %10 = arith.addf %6, %9 : vector<6x128xf32>
    %11 = vector.extract_strided_slice %0 {offsets = [2, 0], sizes = [6, 128], strides = [1, 1]} : vector<16x128xf32> to vector<6x128xf32>
    %cst_8 = arith.constant 0.0360007733 : f32
    %12 = vector.broadcast %cst_8 : f32 to vector<6x128xf32>
    %13 = arith.mulf %12, %11 : vector<6x128xf32>
    %14 = arith.addf %10, %13 : vector<6x128xf32>
    %15 = vector.extract_strided_slice %0 {offsets = [3, 0], sizes = [6, 128], strides = [1, 1]} : vector<16x128xf32> to vector<6x128xf32>
    %cst_9 = arith.constant 0.109360702 : f32
    %16 = vector.broadcast %cst_9 : f32 to vector<6x128xf32>
    %17 = arith.mulf %16, %15 : vector<6x128xf32>
    %18 = arith.addf %14, %17 : vector<6x128xf32>
    %19 = vector.extract_strided_slice %0 {offsets = [4, 0], sizes = [6, 128], strides = [1, 1]} : vector<16x128xf32> to vector<6x128xf32>
    %cst_10 = arith.constant 0.213005543 : f32
    %20 = vector.broadcast %cst_10 : f32 to vector<6x128xf32>
    %21 = arith.mulf %20, %19 : vector<6x128xf32>
    %22 = arith.addf %18, %21 : vector<6x128xf32>
    %23 = vector.extract_strided_slice %0 {offsets = [5, 0], sizes = [6, 128], strides = [1, 1]} : vector<16x128xf32> to vector<6x128xf32>
    %cst_11 = arith.constant 0.266011745 : f32
    %24 = vector.broadcast %cst_11 : f32 to vector<6x128xf32>
    %25 = arith.mulf %24, %23 : vector<6x128xf32>
    %26 = arith.addf %22, %25 : vector<6x128xf32>
    %27 = vector.extract_strided_slice %0 {offsets = [6, 0], sizes = [6, 128], strides = [1, 1]} : vector<16x128xf32> to vector<6x128xf32>
    %cst_12 = arith.constant 0.213005543 : f32
    %28 = vector.broadcast %cst_12 : f32 to vector<6x128xf32>
    %29 = arith.mulf %28, %27 : vector<6x128xf32>
    %30 = arith.addf %26, %29 : vector<6x128xf32>
    %31 = vector.extract_strided_slice %0 {offsets = [7, 0], sizes = [6, 128], strides = [1, 1]} : vector<16x128xf32> to vector<6x128xf32>
    %cst_13 = arith.constant 0.109360702 : f32
    %32 = vector.broadcast %cst_13 : f32 to vector<6x128xf32>
    %33 = arith.mulf %32, %31 : vector<6x128xf32>
    %34 = arith.addf %30, %33 : vector<6x128xf32>
    %35 = vector.extract_strided_slice %0 {offsets = [8, 0], sizes = [6, 128], strides = [1, 1]} : vector<16x128xf32> to vector<6x128xf32>
    %cst_14 = arith.constant 0.0360007733 : f32
    %36 = vector.broadcast %cst_14 : f32 to vector<6x128xf32>
    %37 = arith.mulf %36, %35 : vector<6x128xf32>
    %38 = arith.addf %34, %37 : vector<6x128xf32>
    %39 = vector.extract_strided_slice %0 {offsets = [9, 0], sizes = [6, 128], strides = [1, 1]} : vector<16x128xf32> to vector<6x128xf32>
    %cst_15 = arith.constant 0.00759875868 : f32
    %40 = vector.broadcast %cst_15 : f32 to vector<6x128xf32>
    %41 = arith.mulf %40, %39 : vector<6x128xf32>
    %42 = arith.addf %38, %41 : vector<6x128xf32>
    %43 = vector.extract_strided_slice %0 {offsets = [10, 0], sizes = [6, 128], strides = [1, 1]} : vector<16x128xf32> to vector<6x128xf32>
    %cst_16 = arith.constant 0.00102838036 : f32
    %44 = vector.broadcast %cst_16 : f32 to vector<6x128xf32>
    %45 = arith.mulf %44, %43 : vector<6x128xf32>
    %46 = arith.addf %42, %45 : vector<6x128xf32>
    %cst_17 = arith.constant dense<0.000000e+00> : vector<6x128xf32>
    %47 = tpu.matmul %46, %2, %cst_17 {dimension_numbers = #tpu.dot_dimension_numbers<[1], [0], [0], [1], [0, 0, 1, 1], [], []>} : vector<6x128xf32>, vector<128x128xf32>, vector<6x128xf32> -> vector<6x128xf32>
    %48 = vector.extract_strided_slice %1 {offsets = [0, 0], sizes = [6, 128], strides = [1, 1]} : vector<16x128xf32> to vector<6x128xf32>
    %cst_18 = arith.constant 0.00102838036 : f32
    %49 = vector.broadcast %cst_18 : f32 to vector<6x128xf32>
    %50 = arith.mulf %49, %48 : vector<6x128xf32>
    %51 = vector.extract_strided_slice %1 {offsets = [1, 0], sizes = [6, 128], strides = [1, 1]} : vector<16x128xf32> to vector<6x128xf32>
    %cst_19 = arith.constant 0.00759875868 : f32
    %52 = vector.broadcast %cst_19 : f32 to vector<6x128xf32>
    %53 = arith.mulf %52, %51 : vector<6x128xf32>
    %54 = arith.addf %50, %53 : vector<6x128xf32>
    %55 = vector.extract_strided_slice %1 {offsets = [2, 0], sizes = [6, 128], strides = [1, 1]} : vector<16x128xf32> to vector<6x128xf32>
    %cst_20 = arith.constant 0.0360007733 : f32
    %56 = vector.broadcast %cst_20 : f32 to vector<6x128xf32>
    %57 = arith.mulf %56, %55 : vector<6x128xf32>
    %58 = arith.addf %54, %57 : vector<6x128xf32>
    %59 = vector.extract_strided_slice %1 {offsets = [3, 0], sizes = [6, 128], strides = [1, 1]} : vector<16x128xf32> to vector<6x128xf32>
    %cst_21 = arith.constant 0.109360702 : f32
    %60 = vector.broadcast %cst_21 : f32 to vector<6x128xf32>
    %61 = arith.mulf %60, %59 : vector<6x128xf32>
    %62 = arith.addf %58, %61 : vector<6x128xf32>
    %63 = vector.extract_strided_slice %1 {offsets = [4, 0], sizes = [6, 128], strides = [1, 1]} : vector<16x128xf32> to vector<6x128xf32>
    %cst_22 = arith.constant 0.213005543 : f32
    %64 = vector.broadcast %cst_22 : f32 to vector<6x128xf32>
    %65 = arith.mulf %64, %63 : vector<6x128xf32>
    %66 = arith.addf %62, %65 : vector<6x128xf32>
    %67 = vector.extract_strided_slice %1 {offsets = [5, 0], sizes = [6, 128], strides = [1, 1]} : vector<16x128xf32> to vector<6x128xf32>
    %cst_23 = arith.constant 0.266011745 : f32
    %68 = vector.broadcast %cst_23 : f32 to vector<6x128xf32>
    %69 = arith.mulf %68, %67 : vector<6x128xf32>
    %70 = arith.addf %66, %69 : vector<6x128xf32>
    %71 = vector.extract_strided_slice %1 {offsets = [6, 0], sizes = [6, 128], strides = [1, 1]} : vector<16x128xf32> to vector<6x128xf32>
    %cst_24 = arith.constant 0.213005543 : f32
    %72 = vector.broadcast %cst_24 : f32 to vector<6x128xf32>
    %73 = arith.mulf %72, %71 : vector<6x128xf32>
    %74 = arith.addf %70, %73 : vector<6x128xf32>
    %75 = vector.extract_strided_slice %1 {offsets = [7, 0], sizes = [6, 128], strides = [1, 1]} : vector<16x128xf32> to vector<6x128xf32>
    %cst_25 = arith.constant 0.109360702 : f32
    %76 = vector.broadcast %cst_25 : f32 to vector<6x128xf32>
    %77 = arith.mulf %76, %75 : vector<6x128xf32>
    %78 = arith.addf %74, %77 : vector<6x128xf32>
    %79 = vector.extract_strided_slice %1 {offsets = [8, 0], sizes = [6, 128], strides = [1, 1]} : vector<16x128xf32> to vector<6x128xf32>
    %cst_26 = arith.constant 0.0360007733 : f32
    %80 = vector.broadcast %cst_26 : f32 to vector<6x128xf32>
    %81 = arith.mulf %80, %79 : vector<6x128xf32>
    %82 = arith.addf %78, %81 : vector<6x128xf32>
    %83 = vector.extract_strided_slice %1 {offsets = [9, 0], sizes = [6, 128], strides = [1, 1]} : vector<16x128xf32> to vector<6x128xf32>
    %cst_27 = arith.constant 0.00759875868 : f32
    %84 = vector.broadcast %cst_27 : f32 to vector<6x128xf32>
    %85 = arith.mulf %84, %83 : vector<6x128xf32>
    %86 = arith.addf %82, %85 : vector<6x128xf32>
    %87 = vector.extract_strided_slice %1 {offsets = [10, 0], sizes = [6, 128], strides = [1, 1]} : vector<16x128xf32> to vector<6x128xf32>
    %cst_28 = arith.constant 0.00102838036 : f32
    %88 = vector.broadcast %cst_28 : f32 to vector<6x128xf32>
    %89 = arith.mulf %88, %87 : vector<6x128xf32>
    %90 = arith.addf %86, %89 : vector<6x128xf32>
    %cst_29 = arith.constant dense<0.000000e+00> : vector<6x128xf32>
    %91 = tpu.matmul %90, %2, %cst_29 {dimension_numbers = #tpu.dot_dimension_numbers<[1], [0], [0], [1], [0, 0, 1, 1], [], []>} : vector<6x128xf32>, vector<128x128xf32>, vector<6x128xf32> -> vector<6x128xf32>
    %92 = arith.mulf %0, %0 : vector<16x128xf32>
    %93 = vector.extract_strided_slice %92 {offsets = [0, 0], sizes = [6, 128], strides = [1, 1]} : vector<16x128xf32> to vector<6x128xf32>
    %cst_30 = arith.constant 0.00102838036 : f32
    %94 = vector.broadcast %cst_30 : f32 to vector<6x128xf32>
    %95 = arith.mulf %94, %93 : vector<6x128xf32>
    %96 = vector.extract_strided_slice %92 {offsets = [1, 0], sizes = [6, 128], strides = [1, 1]} : vector<16x128xf32> to vector<6x128xf32>
    %cst_31 = arith.constant 0.00759875868 : f32
    %97 = vector.broadcast %cst_31 : f32 to vector<6x128xf32>
    %98 = arith.mulf %97, %96 : vector<6x128xf32>
    %99 = arith.addf %95, %98 : vector<6x128xf32>
    %100 = vector.extract_strided_slice %92 {offsets = [2, 0], sizes = [6, 128], strides = [1, 1]} : vector<16x128xf32> to vector<6x128xf32>
    %cst_32 = arith.constant 0.0360007733 : f32
    %101 = vector.broadcast %cst_32 : f32 to vector<6x128xf32>
    %102 = arith.mulf %101, %100 : vector<6x128xf32>
    %103 = arith.addf %99, %102 : vector<6x128xf32>
    %104 = vector.extract_strided_slice %92 {offsets = [3, 0], sizes = [6, 128], strides = [1, 1]} : vector<16x128xf32> to vector<6x128xf32>
    %cst_33 = arith.constant 0.109360702 : f32
    %105 = vector.broadcast %cst_33 : f32 to vector<6x128xf32>
    %106 = arith.mulf %105, %104 : vector<6x128xf32>
    %107 = arith.addf %103, %106 : vector<6x128xf32>
    %108 = vector.extract_strided_slice %92 {offsets = [4, 0], sizes = [6, 128], strides = [1, 1]} : vector<16x128xf32> to vector<6x128xf32>
    %cst_34 = arith.constant 0.213005543 : f32
    %109 = vector.broadcast %cst_34 : f32 to vector<6x128xf32>
    %110 = arith.mulf %109, %108 : vector<6x128xf32>
    %111 = arith.addf %107, %110 : vector<6x128xf32>
    %112 = vector.extract_strided_slice %92 {offsets = [5, 0], sizes = [6, 128], strides = [1, 1]} : vector<16x128xf32> to vector<6x128xf32>
    %cst_35 = arith.constant 0.266011745 : f32
    %113 = vector.broadcast %cst_35 : f32 to vector<6x128xf32>
    %114 = arith.mulf %113, %112 : vector<6x128xf32>
    %115 = arith.addf %111, %114 : vector<6x128xf32>
    %116 = vector.extract_strided_slice %92 {offsets = [6, 0], sizes = [6, 128], strides = [1, 1]} : vector<16x128xf32> to vector<6x128xf32>
    %cst_36 = arith.constant 0.213005543 : f32
    %117 = vector.broadcast %cst_36 : f32 to vector<6x128xf32>
    %118 = arith.mulf %117, %116 : vector<6x128xf32>
    %119 = arith.addf %115, %118 : vector<6x128xf32>
    %120 = vector.extract_strided_slice %92 {offsets = [7, 0], sizes = [6, 128], strides = [1, 1]} : vector<16x128xf32> to vector<6x128xf32>
    %cst_37 = arith.constant 0.109360702 : f32
    %121 = vector.broadcast %cst_37 : f32 to vector<6x128xf32>
    %122 = arith.mulf %121, %120 : vector<6x128xf32>
    %123 = arith.addf %119, %122 : vector<6x128xf32>
    %124 = vector.extract_strided_slice %92 {offsets = [8, 0], sizes = [6, 128], strides = [1, 1]} : vector<16x128xf32> to vector<6x128xf32>
    %cst_38 = arith.constant 0.0360007733 : f32
    %125 = vector.broadcast %cst_38 : f32 to vector<6x128xf32>
    %126 = arith.mulf %125, %124 : vector<6x128xf32>
    %127 = arith.addf %123, %126 : vector<6x128xf32>
    %128 = vector.extract_strided_slice %92 {offsets = [9, 0], sizes = [6, 128], strides = [1, 1]} : vector<16x128xf32> to vector<6x128xf32>
    %cst_39 = arith.constant 0.00759875868 : f32
    %129 = vector.broadcast %cst_39 : f32 to vector<6x128xf32>
    %130 = arith.mulf %129, %128 : vector<6x128xf32>
    %131 = arith.addf %127, %130 : vector<6x128xf32>
    %132 = vector.extract_strided_slice %92 {offsets = [10, 0], sizes = [6, 128], strides = [1, 1]} : vector<16x128xf32> to vector<6x128xf32>
    %cst_40 = arith.constant 0.00102838036 : f32
    %133 = vector.broadcast %cst_40 : f32 to vector<6x128xf32>
    %134 = arith.mulf %133, %132 : vector<6x128xf32>
    %135 = arith.addf %131, %134 : vector<6x128xf32>
    %cst_41 = arith.constant dense<0.000000e+00> : vector<6x128xf32>
    %136 = tpu.matmul %135, %2, %cst_41 {dimension_numbers = #tpu.dot_dimension_numbers<[1], [0], [0], [1], [0, 0, 1, 1], [], []>} : vector<6x128xf32>, vector<128x128xf32>, vector<6x128xf32> -> vector<6x128xf32>
    %137 = arith.mulf %1, %1 : vector<16x128xf32>
    %138 = vector.extract_strided_slice %137 {offsets = [0, 0], sizes = [6, 128], strides = [1, 1]} : vector<16x128xf32> to vector<6x128xf32>
    %cst_42 = arith.constant 0.00102838036 : f32
    %139 = vector.broadcast %cst_42 : f32 to vector<6x128xf32>
    %140 = arith.mulf %139, %138 : vector<6x128xf32>
    %141 = vector.extract_strided_slice %137 {offsets = [1, 0], sizes = [6, 128], strides = [1, 1]} : vector<16x128xf32> to vector<6x128xf32>
    %cst_43 = arith.constant 0.00759875868 : f32
    %142 = vector.broadcast %cst_43 : f32 to vector<6x128xf32>
    %143 = arith.mulf %142, %141 : vector<6x128xf32>
    %144 = arith.addf %140, %143 : vector<6x128xf32>
    %145 = vector.extract_strided_slice %137 {offsets = [2, 0], sizes = [6, 128], strides = [1, 1]} : vector<16x128xf32> to vector<6x128xf32>
    %cst_44 = arith.constant 0.0360007733 : f32
    %146 = vector.broadcast %cst_44 : f32 to vector<6x128xf32>
    %147 = arith.mulf %146, %145 : vector<6x128xf32>
    %148 = arith.addf %144, %147 : vector<6x128xf32>
    %149 = vector.extract_strided_slice %137 {offsets = [3, 0], sizes = [6, 128], strides = [1, 1]} : vector<16x128xf32> to vector<6x128xf32>
    %cst_45 = arith.constant 0.109360702 : f32
    %150 = vector.broadcast %cst_45 : f32 to vector<6x128xf32>
    %151 = arith.mulf %150, %149 : vector<6x128xf32>
    %152 = arith.addf %148, %151 : vector<6x128xf32>
    %153 = vector.extract_strided_slice %137 {offsets = [4, 0], sizes = [6, 128], strides = [1, 1]} : vector<16x128xf32> to vector<6x128xf32>
    %cst_46 = arith.constant 0.213005543 : f32
    %154 = vector.broadcast %cst_46 : f32 to vector<6x128xf32>
    %155 = arith.mulf %154, %153 : vector<6x128xf32>
    %156 = arith.addf %152, %155 : vector<6x128xf32>
    %157 = vector.extract_strided_slice %137 {offsets = [5, 0], sizes = [6, 128], strides = [1, 1]} : vector<16x128xf32> to vector<6x128xf32>
    %cst_47 = arith.constant 0.266011745 : f32
    %158 = vector.broadcast %cst_47 : f32 to vector<6x128xf32>
    %159 = arith.mulf %158, %157 : vector<6x128xf32>
    %160 = arith.addf %156, %159 : vector<6x128xf32>
    %161 = vector.extract_strided_slice %137 {offsets = [6, 0], sizes = [6, 128], strides = [1, 1]} : vector<16x128xf32> to vector<6x128xf32>
    %cst_48 = arith.constant 0.213005543 : f32
    %162 = vector.broadcast %cst_48 : f32 to vector<6x128xf32>
    %163 = arith.mulf %162, %161 : vector<6x128xf32>
    %164 = arith.addf %160, %163 : vector<6x128xf32>
    %165 = vector.extract_strided_slice %137 {offsets = [7, 0], sizes = [6, 128], strides = [1, 1]} : vector<16x128xf32> to vector<6x128xf32>
    %cst_49 = arith.constant 0.109360702 : f32
    %166 = vector.broadcast %cst_49 : f32 to vector<6x128xf32>
    %167 = arith.mulf %166, %165 : vector<6x128xf32>
    %168 = arith.addf %164, %167 : vector<6x128xf32>
    %169 = vector.extract_strided_slice %137 {offsets = [8, 0], sizes = [6, 128], strides = [1, 1]} : vector<16x128xf32> to vector<6x128xf32>
    %cst_50 = arith.constant 0.0360007733 : f32
    %170 = vector.broadcast %cst_50 : f32 to vector<6x128xf32>
    %171 = arith.mulf %170, %169 : vector<6x128xf32>
    %172 = arith.addf %168, %171 : vector<6x128xf32>
    %173 = vector.extract_strided_slice %137 {offsets = [9, 0], sizes = [6, 128], strides = [1, 1]} : vector<16x128xf32> to vector<6x128xf32>
    %cst_51 = arith.constant 0.00759875868 : f32
    %174 = vector.broadcast %cst_51 : f32 to vector<6x128xf32>
    %175 = arith.mulf %174, %173 : vector<6x128xf32>
    %176 = arith.addf %172, %175 : vector<6x128xf32>
    %177 = vector.extract_strided_slice %137 {offsets = [10, 0], sizes = [6, 128], strides = [1, 1]} : vector<16x128xf32> to vector<6x128xf32>
    %cst_52 = arith.constant 0.00102838036 : f32
    %178 = vector.broadcast %cst_52 : f32 to vector<6x128xf32>
    %179 = arith.mulf %178, %177 : vector<6x128xf32>
    %180 = arith.addf %176, %179 : vector<6x128xf32>
    %cst_53 = arith.constant dense<0.000000e+00> : vector<6x128xf32>
    %181 = tpu.matmul %180, %2, %cst_53 {dimension_numbers = #tpu.dot_dimension_numbers<[1], [0], [0], [1], [0, 0, 1, 1], [], []>} : vector<6x128xf32>, vector<128x128xf32>, vector<6x128xf32> -> vector<6x128xf32>
    %182 = arith.mulf %0, %1 : vector<16x128xf32>
    %183 = vector.extract_strided_slice %182 {offsets = [0, 0], sizes = [6, 128], strides = [1, 1]} : vector<16x128xf32> to vector<6x128xf32>
    %cst_54 = arith.constant 0.00102838036 : f32
    %184 = vector.broadcast %cst_54 : f32 to vector<6x128xf32>
    %185 = arith.mulf %184, %183 : vector<6x128xf32>
    %186 = vector.extract_strided_slice %182 {offsets = [1, 0], sizes = [6, 128], strides = [1, 1]} : vector<16x128xf32> to vector<6x128xf32>
    %cst_55 = arith.constant 0.00759875868 : f32
    %187 = vector.broadcast %cst_55 : f32 to vector<6x128xf32>
    %188 = arith.mulf %187, %186 : vector<6x128xf32>
    %189 = arith.addf %185, %188 : vector<6x128xf32>
    %190 = vector.extract_strided_slice %182 {offsets = [2, 0], sizes = [6, 128], strides = [1, 1]} : vector<16x128xf32> to vector<6x128xf32>
    %cst_56 = arith.constant 0.0360007733 : f32
    %191 = vector.broadcast %cst_56 : f32 to vector<6x128xf32>
    %192 = arith.mulf %191, %190 : vector<6x128xf32>
    %193 = arith.addf %189, %192 : vector<6x128xf32>
    %194 = vector.extract_strided_slice %182 {offsets = [3, 0], sizes = [6, 128], strides = [1, 1]} : vector<16x128xf32> to vector<6x128xf32>
    %cst_57 = arith.constant 0.109360702 : f32
    %195 = vector.broadcast %cst_57 : f32 to vector<6x128xf32>
    %196 = arith.mulf %195, %194 : vector<6x128xf32>
    %197 = arith.addf %193, %196 : vector<6x128xf32>
    %198 = vector.extract_strided_slice %182 {offsets = [4, 0], sizes = [6, 128], strides = [1, 1]} : vector<16x128xf32> to vector<6x128xf32>
    %cst_58 = arith.constant 0.213005543 : f32
    %199 = vector.broadcast %cst_58 : f32 to vector<6x128xf32>
    %200 = arith.mulf %199, %198 : vector<6x128xf32>
    %201 = arith.addf %197, %200 : vector<6x128xf32>
    %202 = vector.extract_strided_slice %182 {offsets = [5, 0], sizes = [6, 128], strides = [1, 1]} : vector<16x128xf32> to vector<6x128xf32>
    %cst_59 = arith.constant 0.266011745 : f32
    %203 = vector.broadcast %cst_59 : f32 to vector<6x128xf32>
    %204 = arith.mulf %203, %202 : vector<6x128xf32>
    %205 = arith.addf %201, %204 : vector<6x128xf32>
    %206 = vector.extract_strided_slice %182 {offsets = [6, 0], sizes = [6, 128], strides = [1, 1]} : vector<16x128xf32> to vector<6x128xf32>
    %cst_60 = arith.constant 0.213005543 : f32
    %207 = vector.broadcast %cst_60 : f32 to vector<6x128xf32>
    %208 = arith.mulf %207, %206 : vector<6x128xf32>
    %209 = arith.addf %205, %208 : vector<6x128xf32>
    %210 = vector.extract_strided_slice %182 {offsets = [7, 0], sizes = [6, 128], strides = [1, 1]} : vector<16x128xf32> to vector<6x128xf32>
    %cst_61 = arith.constant 0.109360702 : f32
    %211 = vector.broadcast %cst_61 : f32 to vector<6x128xf32>
    %212 = arith.mulf %211, %210 : vector<6x128xf32>
    %213 = arith.addf %209, %212 : vector<6x128xf32>
    %214 = vector.extract_strided_slice %182 {offsets = [8, 0], sizes = [6, 128], strides = [1, 1]} : vector<16x128xf32> to vector<6x128xf32>
    %cst_62 = arith.constant 0.0360007733 : f32
    %215 = vector.broadcast %cst_62 : f32 to vector<6x128xf32>
    %216 = arith.mulf %215, %214 : vector<6x128xf32>
    %217 = arith.addf %213, %216 : vector<6x128xf32>
    %218 = vector.extract_strided_slice %182 {offsets = [9, 0], sizes = [6, 128], strides = [1, 1]} : vector<16x128xf32> to vector<6x128xf32>
    %cst_63 = arith.constant 0.00759875868 : f32
    %219 = vector.broadcast %cst_63 : f32 to vector<6x128xf32>
    %220 = arith.mulf %219, %218 : vector<6x128xf32>
    %221 = arith.addf %217, %220 : vector<6x128xf32>
    %222 = vector.extract_strided_slice %182 {offsets = [10, 0], sizes = [6, 128], strides = [1, 1]} : vector<16x128xf32> to vector<6x128xf32>
    %cst_64 = arith.constant 0.00102838036 : f32
    %223 = vector.broadcast %cst_64 : f32 to vector<6x128xf32>
    %224 = arith.mulf %223, %222 : vector<6x128xf32>
    %225 = arith.addf %221, %224 : vector<6x128xf32>
    %cst_65 = arith.constant dense<0.000000e+00> : vector<6x128xf32>
    %226 = tpu.matmul %225, %2, %cst_65 {dimension_numbers = #tpu.dot_dimension_numbers<[1], [0], [0], [1], [0, 0, 1, 1], [], []>} : vector<6x128xf32>, vector<128x128xf32>, vector<6x128xf32> -> vector<6x128xf32>
    %227 = arith.mulf %47, %47 : vector<6x128xf32>
    %228 = arith.mulf %91, %91 : vector<6x128xf32>
    %229 = arith.mulf %47, %91 : vector<6x128xf32>
    %230 = arith.subf %136, %227 : vector<6x128xf32>
    %231 = arith.subf %181, %228 : vector<6x128xf32>
    %232 = arith.subf %226, %229 : vector<6x128xf32>
    %cst_66 = arith.constant 2.000000e+00 : f32
    %233 = vector.broadcast %cst_66 : f32 to vector<6x128xf32>
    %234 = arith.mulf %233, %229 : vector<6x128xf32>
    %cst_67 = arith.constant 6.502500e+00 : f32
    %235 = vector.broadcast %cst_67 : f32 to vector<6x128xf32>
    %236 = arith.addf %234, %235 : vector<6x128xf32>
    %cst_68 = arith.constant 2.000000e+00 : f32
    %237 = vector.broadcast %cst_68 : f32 to vector<6x128xf32>
    %238 = arith.mulf %237, %232 : vector<6x128xf32>
    %cst_69 = arith.constant 5.852250e+01 : f32
    %239 = vector.broadcast %cst_69 : f32 to vector<6x128xf32>
    %240 = arith.addf %238, %239 : vector<6x128xf32>
    %241 = arith.mulf %236, %240 : vector<6x128xf32>
    %242 = arith.addf %227, %228 : vector<6x128xf32>
    %cst_70 = arith.constant 6.502500e+00 : f32
    %243 = vector.broadcast %cst_70 : f32 to vector<6x128xf32>
    %244 = arith.addf %242, %243 : vector<6x128xf32>
    %245 = arith.addf %230, %231 : vector<6x128xf32>
    %cst_71 = arith.constant 5.852250e+01 : f32
    %246 = vector.broadcast %cst_71 : f32 to vector<6x128xf32>
    %247 = arith.addf %245, %246 : vector<6x128xf32>
    %248 = arith.mulf %244, %247 : vector<6x128xf32>
    %249 = tpu.reciprocal %248 {approx = true} : vector<6x128xf32> -> vector<6x128xf32>
    %250 = arith.mulf %248, %249 : vector<6x128xf32>
    %cst_72 = arith.constant 2.000000e+00 : f32
    %251 = vector.broadcast %cst_72 : f32 to vector<6x128xf32>
    %252 = arith.subf %251, %250 : vector<6x128xf32>
    %253 = arith.mulf %249, %252 : vector<6x128xf32>
    %254 = arith.mulf %241, %253 : vector<6x128xf32>
    %255 = arith.mulf %3, %254 : vector<6x128xf32>
    %cst_73 = arith.constant dense<0.000000e+00> : vector<128xf32>
    %256 = vector.multi_reduction <add>, %255, %cst_73 [0] : vector<6x128xf32> to vector<128xf32>
    %257 = vector.shape_cast %256 : vector<128xf32> to vector<1x128xf32>
    %258 = vector.shape_cast %257 : vector<1x128xf32> to vector<1x1x128xf32>
    %c0_74 = arith.constant 0 : index
    %c0_75 = arith.constant 0 : index
    %c0_76 = arith.constant 0 : index
    %259 = vector.load %arg5[%c0_74, %c0_75, %c0_76] : memref<1x1x128xf32, #tpu.memory_space<vmem>>, vector<1x1x128xf32>
    tpu.vector_store %arg5[%c0_74, %c0_75, %c0_76], %258 {strides = array<i32>} : memref<1x1x128xf32, #tpu.memory_space<vmem>>, vector<1x1x128xf32>,
    return
  }
  func.func @transform_0(%arg0: i32) -> (i32, i32) {
    %c0_i32 = arith.constant 0 : i32
    %c0_i32_0 = arith.constant 0 : i32
    return %c0_i32, %arg0 : i32, i32
  }
  func.func @transform_1(%arg0: i32) -> (i32, i32) {
    %c0_i32 = arith.constant 0 : i32
    %c0_i32_0 = arith.constant 0 : i32
    return %c0_i32, %arg0 : i32, i32
  }
  func.func @transform_2(%arg0: i32) -> (i32, i32) {
    %c0_i32 = arith.constant 0 : i32
    %c0_i32_0 = arith.constant 0 : i32
    %c0_i32_1 = arith.constant 0 : i32
    return %c0_i32, %c0_i32_0 : i32, i32
  }
  func.func @transform_3(%arg0: i32) -> (i32, i32) {
    %c0_i32 = arith.constant 0 : i32
    %c0_i32_0 = arith.constant 0 : i32
    %c0_i32_1 = arith.constant 0 : i32
    return %c0_i32, %c0_i32_0 : i32, i32
  }
  func.func @transform_4(%arg0: i32) -> (i32, i32, i32) {
    %c0_i32 = arith.constant 0 : i32
    %c0_i32_0 = arith.constant 0 : i32
    %c0_i32_1 = arith.constant 0 : i32
    return %arg0, %c0_i32, %c0_i32_0 : i32, i32, i32
  }
}

</mosaic_0001>

<llo_original>
// kernel: tpu_custom_call.1
$region0: #{tpu_custom_call.1}
  #allocation0 [shape = 'u32[]', space=smem, size = 0x4, offset = 0x4, fixed_abs, tag = 'smem constant byte address 0x4 - core index']
  #allocation1 [shape = 'u32[144,128]{1,0:T(1,128)}', space=vmem, size = 0x12000, scoped, tag = 'internal scratch']
  %s0 = inlined_call_operand.hbm [shape: f32[16,128], index: 0, kind: input, shape index: {}]
  %s1 = inlined_call_operand.hbm [shape: f32[16,128], index: 1, kind: input, shape index: {}]
  %s2 = inlined_call_operand.hbm [shape: f32[128,128], index: 2, kind: input, shape index: {}]
  %s3 = inlined_call_operand.vmem [shape: f32[6,128], index: 3, kind: input, shape index: {}]
  %s4 = inlined_call_operand.hbm [shape: f32[1,1,128], index: 4, kind: output, shape index: {}]
  %s5 = sld [smem:[#allocation0]]
  $region38: #{tpu_custom_call.1} parent=0
    _
  %s7 = ssub.s32 1, %s5
  %s8 = scalar_select 0, %s7, %s5
  $region1: #{tpu_custom_call.1} parent=0
    #allocation2 [shape = 'u8[8192]{0}', space=vmem, size = 0x2000, scoped, tag = 'input window, operand 0, single buffered']
    #allocation3 [shape = 's32[1]{0}', space=sflag, size = 0x4, scoped, tag = 'scoped memory for tpu_custom_call.1']
    #allocation4 [shape = 's32[1]{0}', space=sflag, size = 0x4, scoped, tag = 'scoped memory for tpu_custom_call.1']
    #allocation5 [shape = 'u8[8192]{0}', space=vmem, size = 0x2000, scoped, tag = 'input window, operand 1, single buffered']
    #allocation6 [shape = 's32[1]{0}', space=sflag, size = 0x4, scoped, tag = 'scoped memory for tpu_custom_call.1']
    #allocation7 [shape = 'u8[65536]{0}', space=vmem, size = 0x10000, scoped, tag = 'input window, operand 2, single buffered']
    #allocation8 [shape = 'u8[512]{0}', space=vmem, size = 0x400, scoped, tag = 'output window, operand 0, single buffered']
    %9 = vsyncpa [#allocation3], 0
    %10 = vsyncpa [#allocation6], 0
    %11 = vsyncpa [#allocation4], 0
    // Predicated region
    $region2: #{tpu_custom_call.1} parent=1 // pred_check
      _
    $region3: #{tpu_custom_call.1} parent=1 // pred_check_branch
      %13 = sbr.rel (0) target = $region5
    $region4: #{tpu_custom_call.1} parent=1 // pred_region
      %s15 = ssub.s32 256, 256
      %16 = vsyncadd [#allocation3], %s15
      %s17 = sshll.u32 [#allocation2], 4
      %s18 = int_to_ptr.vmem [resolvable:$true] %s17
      %23 = dma.hbm_to_vmem [thread:$0]  %s0, 256, %s18, [#allocation3], 128, 128, 8
    $region5: #{tpu_custom_call.1} parent=1 // pred_fallthru
      _
    // Predicated region
    $region6: #{tpu_custom_call.1} parent=1 // pred_check
      _
    $region7: #{tpu_custom_call.1} parent=1 // pred_check_branch
      %25 = sbr.rel (0) target = $region9
    $region8: #{tpu_custom_call.1} parent=1 // pred_region
      %s27 = ssub.s32 256, 256
      %28 = vsyncadd [#allocation6], %s27
      %s29 = sshll.u32 [#allocation5], 4
      %s30 = int_to_ptr.vmem [resolvable:$true] %s29
      %35 = dma.hbm_to_vmem [thread:$0]  %s1, 256, %s30, [#allocation6], 128, 128, 8
    $region9: #{tpu_custom_call.1} parent=1 // pred_fallthru
      _
    // Predicated region
    $region10: #{tpu_custom_call.1} parent=1 // pred_check
      _
    $region11: #{tpu_custom_call.1} parent=1 // pred_check_branch
      %37 = sbr.rel (0) target = $region13
    $region12: #{tpu_custom_call.1} parent=1 // pred_region
      %s39 = ssub.s32 2048, 2048
      %40 = vsyncadd [#allocation6], %s39
      %s41 = sshll.u32 [#allocation7], 4
      %s42 = int_to_ptr.vmem [resolvable:$true] %s41
      %47 = dma.hbm_to_vmem [thread:$0]  %s2, 2048, %s42, [#allocation6], 128, 128, 8
    $region13: #{tpu_custom_call.1} parent=1 // pred_fallthru
      _
    // Predicated region
    $region14: #{tpu_custom_call.1} parent=1 // pred_check
      _
    $region15: #{tpu_custom_call.1} parent=1 // pred_check_branch
      %49 = sbr.rel (0) target = $region17
    $region16: #{tpu_custom_call.1} parent=1 // pred_region
      _
    $region17: #{tpu_custom_call.1} parent=1 // pred_fallthru
      _
    // Predicated region
    $region18: #{tpu_custom_call.1} parent=1 // pred_check
      _
    $region19: #{tpu_custom_call.1} parent=1 // pred_check_branch
      %51 = sbr.rel (0) target = $region21
    $region20: #{tpu_custom_call.1} parent=1 // pred_region
      %52 = dma.done [#allocation3], 256
    $region21: #{tpu_custom_call.1} parent=1 // pred_fallthru
      _
    // Predicated region
    $region22: #{tpu_custom_call.1} parent=1 // pred_check
      _
    $region23: #{tpu_custom_call.1} parent=1 // pred_check_branch
      %54 = sbr.rel (0) target = $region25
    $region24: #{tpu_custom_call.1} parent=1 // pred_region
      %55 = dma.done [#allocation6], 256
    $region25: #{tpu_custom_call.1} parent=1 // pred_fallthru
      _
    // Predicated region
    $region26: #{tpu_custom_call.1} parent=1 // pred_check
      _
    $region27: #{tpu_custom_call.1} parent=1 // pred_check_branch
      %57 = sbr.rel (0) target = $region29
    $region28: #{tpu_custom_call.1} parent=1 // pred_region
      %58 = dma.done [#allocation6], 2048
    $region29: #{tpu_custom_call.1} parent=1 // pred_fallthru
      _
    %v59 = vld [vmem:[#allocation2] sm:$0xff]
    %v60 = vld [vmem:[#allocation2 + $0x8] sm:$0xff]
    %v61 = vld [vmem:[#allocation5] sm:$0xff]
    %v62 = vld [vmem:[#allocation5 + $0x8] sm:$0xff]
    %v63 = vld [vmem:[#allocation7] sm:$0xff]
    %v64 = vld [vmem:[#allocation7 + $0x8] sm:$0xff]
    %v65 = vld [vmem:[#allocation7 + $0x10] sm:$0xff]
    %v66 = vld [vmem:[#allocation7 + $0x18] sm:$0xff]
    %v67 = vld [vmem:[#allocation7 + $0x20] sm:$0xff]
    %v68 = vld [vmem:[#allocation7 + $0x28] sm:$0xff]
    %v69 = vld [vmem:[#allocation7 + $0x30] sm:$0xff]
    %v70 = vld [vmem:[#allocation7 + $0x38] sm:$0xff]
    %v71 = vld [vmem:[#allocation7 + $0x40] sm:$0xff]
    %v72 = vld [vmem:[#allocation7 + $0x48] sm:$0xff]
    %v73 = vld [vmem:[#allocation7 + $0x50] sm:$0xff]
    %v74 = vld [vmem:[#allocation7 + $0x58] sm:$0xff]
    %v75 = vld [vmem:[#allocation7 + $0x60] sm:$0xff]
    %v76 = vld [vmem:[#allocation7 + $0x68] sm:$0xff]
    %v77 = vld [vmem:[#allocation7 + $0x70] sm:$0xff]
    %v78 = vld [vmem:[#allocation7 + $0x78] sm:$0xff]
    %v79 = vld [vmem:[%s3] sm:$0x3f]
    %v80 = vmul.f32 %v59, 0.0010283804
    %v81 = vmul.f32 %v59, 0.0075987587
    %v83 = vrot.slane %v81, 1
    %v85 = vadd.f32 %v80, %v83
    %v86 = vmul.f32 %v59, 0.036000773
    %v88 = vrot.slane %v86, 2
    %v90 = vadd.f32 %v85, %v88
    %v91 = vmul.f32 %v59, 0.1093607
    %v92 = vmul.f32 %v60, 0.1093607
    %vm95 = vcmask 1044480
    %v96 = vrot.slane %v91, 3
    %v97 = vrot.slane %v92, 3
    %v98 = vsel %vm95, %v96, %v97
    %v100 = vadd.f32 %v90, %v98
    %v101 = vmul.f32 %v59, 0.21300554
    %v102 = vmul.f32 %v60, 0.21300554
    %vm105 = vcmask 1043456
    %v106 = vrot.slane %v101, 4
    %v107 = vrot.slane %v102, 4
    %v108 = vsel %vm105, %v106, %v107
    %v110 = vadd.f32 %v100, %v108
    %v111 = vmul.f32 %v59, 0.26601174
    %v112 = vmul.f32 %v60, 0.26601174
    %vm115 = vcmask 1042432
    %v116 = vrot.slane %v111, 5
    %v117 = vrot.slane %v112, 5
    %v118 = vsel %vm115, %v116, %v117
    %v120 = vadd.f32 %v110, %v118
    %vm121 = vcmask 1041408
    %v122 = vrot.slane %v101, 6
    %v123 = vrot.slane %v102, 6
    %v124 = vsel %vm121, %v122, %v123
    %v126 = vadd.f32 %v120, %v124
    %vm127 = vcmask 1040384
    %v128 = vrot.slane %v91, 7
    %v129 = vrot.slane %v92, 7
    %v130 = vsel %vm127, %v128, %v129
    %v132 = vadd.f32 %v126, %v130
    %v133 = vmul.f32 %v60, 0.036000773
    %v134 = vadd.f32 %v132, %v133
    %v135 = vmul.f32 %v60, 0.0075987587
    %v137 = vrot.slane %v135, 1
    %v139 = vadd.f32 %v134, %v137
    %v140 = vmul.f32 %v60, 0.0010283804
    %v142 = vrot.slane %v140, 2
    %v144 = vadd.f32 %v139, %v142
    %145 = vmatprep.subr.mxu0 0.0
    %146 = vmatpush1.msra.mxu0 %v63
    %147 = vmatprep.subr.mxu0 0.0
    %148 = vmatpush1.msra.mxu0 %v64
    %149 = vmatprep.subr.mxu0 0.0
    %150 = vmatpush1.msra.mxu0 %v65
    %151 = vmatprep.subr.mxu0 0.0
    %152 = vmatpush1.msra.mxu0 %v66
    %153 = vmatprep.subr.mxu0 0.0
    %154 = vmatpush1.msra.mxu0 %v67
    %155 = vmatprep.subr.mxu0 0.0
    %156 = vmatpush1.msra.mxu0 %v68
    %157 = vmatprep.subr.mxu0 0.0
    %158 = vmatpush1.msra.mxu0 %v69
    %159 = vmatprep.subr.mxu0 0.0
    %160 = vmatpush1.msra.mxu0 %v70
    %161 = vmatprep.subr.mxu0 0.0
    %162 = vmatpush1.msra.mxu0 %v71
    %163 = vmatprep.subr.mxu0 0.0
    %164 = vmatpush1.msra.mxu0 %v72
    %165 = vmatprep.subr.mxu0 0.0
    %166 = vmatpush1.msra.mxu0 %v73
    %167 = vmatprep.subr.mxu0 0.0
    %168 = vmatpush1.msra.mxu0 %v74
    %169 = vmatprep.subr.mxu0 0.0
    %170 = vmatpush1.msra.mxu0 %v75
    %171 = vmatprep.subr.mxu0 0.0
    %172 = vmatpush1.msra.mxu0 %v76
    %173 = vmatprep.subr.mxu0 0.0
    %174 = vmatpush1.msra.mxu0 %v77
    %175 = vmatprep.subr.mxu0 0.0
    %176 = vmatpush1.msra.mxu0 %v78
    %177 = vmatprep.subr.mxu0 0.0
    %178 = vmatpush1.msra.mxu0 0.0
    %179 = vmatprep.subr.mxu0 0.0
    %180 = vmatpush1.msra.mxu0 0.0
    %181 = vmatprep.subr.mxu0 0.0
    %182 = vmatpush1.msra.mxu0 0.0
    %183 = vmatprep.subr.mxu0 0.0
    %184 = vmatpush1.msra.mxu0 0.0
    %185 = vmatprep.subr.mxu0 0.0
    %186 = vmatpush1.msra.mxu0 0.0
    %187 = vmatprep.subr.mxu0 0.0
    %188 = vmatpush1.msra.mxu0 0.0
    %189 = vmatprep.subr.mxu0 0.0
    %190 = vmatpush1.msra.mxu0 0.0
    %191 = vmatprep.subr.mxu0 0.0
    %192 = vmatpush1.msra.mxu0 0.0
    %193 = vmatprep.subr.mxu0 0.0
    %194 = vmatpush1.msra.mxu0 0.0
    %195 = vmatprep.subr.mxu0 0.0
    %196 = vmatpush1.msra.mxu0 0.0
    %197 = vmatprep.subr.mxu0 0.0
    %198 = vmatpush1.msra.mxu0 0.0
    %199 = vmatprep.subr.mxu0 0.0
    %200 = vmatpush1.msra.mxu0 0.0
    %201 = vmatprep.subr.mxu0 0.0
    %202 = vmatpush1.msra.mxu0 0.0
    %203 = vmatprep.subr.mxu0 0.0
    %204 = vmatpush1.msra.mxu0 0.0
    %205 = vmatprep.subr.mxu0 0.0
    %206 = vmatpush1.msra.mxu0 0.0
    %207 = vmatprep.subr.mxu0 0.0
    %208 = vmatpush1.msra.mxu0 0.0
    %209 = vmatprep.mubr.f32.mxu0 0.0
    %210 = vmatmul.mubr.f32.gmra.mrb[0].mxu0 %v144
    %v211 = vpop.f32.mrb[0].mxu0
    %v212 = vadd.f32 0.0, %v211
    %v213 = vpop.f32.mrb[0].mxu0
    %214 = vdwg.mxu0
    %v215 = vmul.f32 %v61, 0.0010283804
    %v216 = vmul.f32 %v61, 0.0075987587
    %v218 = vrot.slane %v216, 1
    %v220 = vadd.f32 %v215, %v218
    %v221 = vmul.f32 %v61, 0.036000773
    %v223 = vrot.slane %v221, 2
    %v225 = vadd.f32 %v220, %v223
    %v226 = vmul.f32 %v61, 0.1093607
    %v227 = vmul.f32 %v62, 0.1093607
    %v230 = vrot.slane %v226, 3
    %v231 = vrot.slane %v227, 3
    %v232 = vsel %vm95, %v230, %v231
    %v234 = vadd.f32 %v225, %v232
    %v235 = vmul.f32 %v61, 0.21300554
    %v236 = vmul.f32 %v62, 0.21300554
    %v239 = vrot.slane %v235, 4
    %v240 = vrot.slane %v236, 4
    %v241 = vsel %vm105, %v239, %v240
    %v243 = vadd.f32 %v234, %v241
    %v244 = vmul.f32 %v61, 0.26601174
    %v245 = vmul.f32 %v62, 0.26601174
    %v248 = vrot.slane %v244, 5
    %v249 = vrot.slane %v245, 5
    %v250 = vsel %vm115, %v248, %v249
    %v252 = vadd.f32 %v243, %v250
    %v253 = vrot.slane %v235, 6
    %v254 = vrot.slane %v236, 6
    %v255 = vsel %vm121, %v253, %v254
    %v257 = vadd.f32 %v252, %v255
    %v258 = vrot.slane %v226, 7
    %v259 = vrot.slane %v227, 7
    %v260 = vsel %vm127, %v258, %v259
    %v262 = vadd.f32 %v257, %v260
    %v263 = vmul.f32 %v62, 0.036000773
    %v264 = vadd.f32 %v262, %v263
    %v265 = vmul.f32 %v62, 0.0075987587
    %v267 = vrot.slane %v265, 1
    %v269 = vadd.f32 %v264, %v267
    %v270 = vmul.f32 %v62, 0.0010283804
    %v272 = vrot.slane %v270, 2
    %v274 = vadd.f32 %v269, %v272
    %275 = vmatprep.subr.mxu0 0.0
    %276 = vmatpush1.msra.mxu0 %v63
    %277 = vmatprep.subr.mxu0 0.0
    %278 = vmatpush1.msra.mxu0 %v64
    %279 = vmatprep.subr.mxu0 0.0
    %280 = vmatpush1.msra.mxu0 %v65
    %281 = vmatprep.subr.mxu0 0.0
    %282 = vmatpush1.msra.mxu0 %v66
    %283 = vmatprep.subr.mxu0 0.0
    %284 = vmatpush1.msra.mxu0 %v67
    %285 = vmatprep.subr.mxu0 0.0
    %286 = vmatpush1.msra.mxu0 %v68
    %287 = vmatprep.subr.mxu0 0.0
    %288 = vmatpush1.msra.mxu0 %v69
    %289 = vmatprep.subr.mxu0 0.0
    %290 = vmatpush1.msra.mxu0 %v70
    %291 = vmatprep.subr.mxu0 0.0
    %292 = vmatpush1.msra.mxu0 %v71
    %293 = vmatprep.subr.mxu0 0.0
    %294 = vmatpush1.msra.mxu0 %v72
    %295 = vmatprep.subr.mxu0 0.0
    %296 = vmatpush1.msra.mxu0 %v73
    %297 = vmatprep.subr.mxu0 0.0
    %298 = vmatpush1.msra.mxu0 %v74
    %299 = vmatprep.subr.mxu0 0.0
    %300 = vmatpush1.msra.mxu0 %v75
    %301 = vmatprep.subr.mxu0 0.0
    %302 = vmatpush1.msra.mxu0 %v76
    %303 = vmatprep.subr.mxu0 0.0
    %304 = vmatpush1.msra.mxu0 %v77
    %305 = vmatprep.subr.mxu0 0.0
    %306 = vmatpush1.msra.mxu0 %v78
    %307 = vmatprep.subr.mxu0 0.0
    %308 = vmatpush1.msra.mxu0 0.0
    %309 = vmatprep.subr.mxu0 0.0
    %310 = vmatpush1.msra.mxu0 0.0
    %311 = vmatprep.subr.mxu0 0.0
    %312 = vmatpush1.msra.mxu0 0.0
    %313 = vmatprep.subr.mxu0 0.0
    %314 = vmatpush1.msra.mxu0 0.0
    %315 = vmatprep.subr.mxu0 0.0
    %316 = vmatpush1.msra.mxu0 0.0
    %317 = vmatprep.subr.mxu0 0.0
    %318 = vmatpush1.msra.mxu0 0.0
    %319 = vmatprep.subr.mxu0 0.0
    %320 = vmatpush1.msra.mxu0 0.0
    %321 = vmatprep.subr.mxu0 0.0
    %322 = vmatpush1.msra.mxu0 0.0
    %323 = vmatprep.subr.mxu0 0.0
    %324 = vmatpush1.msra.mxu0 0.0
    %325 = vmatprep.subr.mxu0 0.0
    %326 = vmatpush1.msra.mxu0 0.0
    %327 = vmatprep.subr.mxu0 0.0
    %328 = vmatpush1.msra.mxu0 0.0
    %329 = vmatprep.subr.mxu0 0.0
    %330 = vmatpush1.msra.mxu0 0.0
    %331 = vmatprep.subr.mxu0 0.0
    %332 = vmatpush1.msra.mxu0 0.0
    %333 = vmatprep.subr.mxu0 0.0
    %334 = vmatpush1.msra.mxu0 0.0
    %335 = vmatprep.subr.mxu0 0.0
    %336 = vmatpush1.msra.mxu0 0.0
    %337 = vmatprep.subr.mxu0 0.0
    %338 = vmatpush1.msra.mxu0 0.0
    %339 = vmatprep.mubr.f32.mxu0 0.0
    %340 = vmatmul.mubr.f32.gmra.mrb[0].mxu0 %v274
    %v341 = vpop.f32.mrb[0].mxu0
    %v342 = vadd.f32 0.0, %v341
    %v343 = vpop.f32.mrb[0].mxu0
    %344 = vdwg.mxu0
    %v345 = vmul.f32 %v59, %v59
    %v346 = vmul.f32 %v60, %v60
    %v347 = vmul.f32 %v345, 0.0010283804
    %v348 = vmul.f32 %v345, 0.0075987587
    %v350 = vrot.slane %v348, 1
    %v352 = vadd.f32 %v347, %v350
    %v353 = vmul.f32 %v345, 0.036000773
    %v355 = vrot.slane %v353, 2
    %v357 = vadd.f32 %v352, %v355
    %v358 = vmul.f32 %v345, 0.1093607
    %v359 = vmul.f32 %v346, 0.1093607
    %v362 = vrot.slane %v358, 3
    %v363 = vrot.slane %v359, 3
    %v364 = vsel %vm95, %v362, %v363
    %v366 = vadd.f32 %v357, %v364
    %v367 = vmul.f32 %v345, 0.21300554
    %v368 = vmul.f32 %v346, 0.21300554
    %v371 = vrot.slane %v367, 4
    %v372 = vrot.slane %v368, 4
    %v373 = vsel %vm105, %v371, %v372
    %v375 = vadd.f32 %v366, %v373
    %v376 = vmul.f32 %v345, 0.26601174
    %v377 = vmul.f32 %v346, 0.26601174
    %v380 = vrot.slane %v376, 5
    %v381 = vrot.slane %v377, 5
    %v382 = vsel %vm115, %v380, %v381
    %v384 = vadd.f32 %v375, %v382
    %v385 = vrot.slane %v367, 6
    %v386 = vrot.slane %v368, 6
    %v387 = vsel %vm121, %v385, %v386
    %v389 = vadd.f32 %v384, %v387
    %v390 = vrot.slane %v358, 7
    %v391 = vrot.slane %v359, 7
    %v392 = vsel %vm127, %v390, %v391
    %v394 = vadd.f32 %v389, %v392
    %v395 = vmul.f32 %v346, 0.036000773
    %v396 = vadd.f32 %v394, %v395
    %v397 = vmul.f32 %v346, 0.0075987587
    %v399 = vrot.slane %v397, 1
    %v401 = vadd.f32 %v396, %v399
    %v402 = vmul.f32 %v346, 0.0010283804
    %v404 = vrot.slane %v402, 2
    %v406 = vadd.f32 %v401, %v404
    %407 = vmatprep.subr.mxu0 0.0
    %408 = vmatpush1.msra.mxu0 %v63
    %409 = vmatprep.subr.mxu0 0.0
    %410 = vmatpush1.msra.mxu0 %v64
    %411 = vmatprep.subr.mxu0 0.0
    %412 = vmatpush1.msra.mxu0 %v65
    %413 = vmatprep.subr.mxu0 0.0
    %414 = vmatpush1.msra.mxu0 %v66
    %415 = vmatprep.subr.mxu0 0.0
    %416 = vmatpush1.msra.mxu0 %v67
    %417 = vmatprep.subr.mxu0 0.0
    %418 = vmatpush1.msra.mxu0 %v68
    %419 = vmatprep.subr.mxu0 0.0
    %420 = vmatpush1.msra.mxu0 %v69
    %421 = vmatprep.subr.mxu0 0.0
    %422 = vmatpush1.msra.mxu0 %v70
    %423 = vmatprep.subr.mxu0 0.0
    %424 = vmatpush1.msra.mxu0 %v71
    %425 = vmatprep.subr.mxu0 0.0
    %426 = vmatpush1.msra.mxu0 %v72
    %427 = vmatprep.subr.mxu0 0.0
    %428 = vmatpush1.msra.mxu0 %v73
    %429 = vmatprep.subr.mxu0 0.0
    %430 = vmatpush1.msra.mxu0 %v74
    %431 = vmatprep.subr.mxu0 0.0
    %432 = vmatpush1.msra.mxu0 %v75
    %433 = vmatprep.subr.mxu0 0.0
    %434 = vmatpush1.msra.mxu0 %v76
    %435 = vmatprep.subr.mxu0 0.0
    %436 = vmatpush1.msra.mxu0 %v77
    %437 = vmatprep.subr.mxu0 0.0
    %438 = vmatpush1.msra.mxu0 %v78
    %439 = vmatprep.subr.mxu0 0.0
    %440 = vmatpush1.msra.mxu0 0.0
    %441 = vmatprep.subr.mxu0 0.0
    %442 = vmatpush1.msra.mxu0 0.0
    %443 = vmatprep.subr.mxu0 0.0
    %444 = vmatpush1.msra.mxu0 0.0
    %445 = vmatprep.subr.mxu0 0.0
    %446 = vmatpush1.msra.mxu0 0.0
    %447 = vmatprep.subr.mxu0 0.0
    %448 = vmatpush1.msra.mxu0 0.0
    %449 = vmatprep.subr.mxu0 0.0
    %450 = vmatpush1.msra.mxu0 0.0
    %451 = vmatprep.subr.mxu0 0.0
    %452 = vmatpush1.msra.mxu0 0.0
    %453 = vmatprep.subr.mxu0 0.0
    %454 = vmatpush1.msra.mxu0 0.0
    %455 = vmatprep.subr.mxu0 0.0
    %456 = vmatpush1.msra.mxu0 0.0
    %457 = vmatprep.subr.mxu0 0.0
    %458 = vmatpush1.msra.mxu0 0.0
    %459 = vmatprep.subr.mxu0 0.0
    %460 = vmatpush1.msra.mxu0 0.0
    %461 = vmatprep.subr.mxu0 0.0
    %462 = vmatpush1.msra.mxu0 0.0
    %463 = vmatprep.subr.mxu0 0.0
    %464 = vmatpush1.msra.mxu0 0.0
    %465 = vmatprep.subr.mxu0 0.0
    %466 = vmatpush1.msra.mxu0 0.0
    %467 = vmatprep.subr.mxu0 0.0
    %468 = vmatpush1.msra.mxu0 0.0
    %469 = vmatprep.subr.mxu0 0.0
    %470 = vmatpush1.msra.mxu0 0.0
    %471 = vmatprep.mubr.f32.mxu0 0.0
    %472 = vmatmul.mubr.f32.gmra.mrb[0].mxu0 %v406
    %v473 = vpop.f32.mrb[0].mxu0
    %v474 = vadd.f32 0.0, %v473
    %v475 = vpop.f32.mrb[0].mxu0
    %476 = vdwg.mxu0
    %v477 = vmul.f32 %v61, %v61
    %v478 = vmul.f32 %v62, %v62
    %v479 = vmul.f32 %v477, 0.0010283804
    %v480 = vmul.f32 %v477, 0.0075987587
    %v482 = vrot.slane %v480, 1
    %v484 = vadd.f32 %v479, %v482
    %v485 = vmul.f32 %v477, 0.036000773
    %v487 = vrot.slane %v485, 2
    %v489 = vadd.f32 %v484, %v487
    %v490 = vmul.f32 %v477, 0.1093607
    %v491 = vmul.f32 %v478, 0.1093607
    %v494 = vrot.slane %v490, 3
    %v495 = vrot.slane %v491, 3
    %v496 = vsel %vm95, %v494, %v495
    %v498 = vadd.f32 %v489, %v496
    %v499 = vmul.f32 %v477, 0.21300554
    %v500 = vmul.f32 %v478, 0.21300554
    %v503 = vrot.slane %v499, 4
    %v504 = vrot.slane %v500, 4
    %v505 = vsel %vm105, %v503, %v504
    %v507 = vadd.f32 %v498, %v505
    %v508 = vmul.f32 %v477, 0.26601174
    %v509 = vmul.f32 %v478, 0.26601174
    %v512 = vrot.slane %v508, 5
    %v513 = vrot.slane %v509, 5
    %v514 = vsel %vm115, %v512, %v513
    %v516 = vadd.f32 %v507, %v514
    %v517 = vrot.slane %v499, 6
    %v518 = vrot.slane %v500, 6
    %v519 = vsel %vm121, %v517, %v518
    %v521 = vadd.f32 %v516, %v519
    %v522 = vrot.slane %v490, 7
    %v523 = vrot.slane %v491, 7
    %v524 = vsel %vm127, %v522, %v523
    %v526 = vadd.f32 %v521, %v524
    %v527 = vmul.f32 %v478, 0.036000773
    %v528 = vadd.f32 %v526, %v527
    %v529 = vmul.f32 %v478, 0.0075987587
    %v531 = vrot.slane %v529, 1
    %v533 = vadd.f32 %v528, %v531
    %v534 = vmul.f32 %v478, 0.0010283804
    %v536 = vrot.slane %v534, 2
    %v538 = vadd.f32 %v533, %v536
    %539 = vmatprep.subr.mxu0 0.0
    %540 = vmatpush1.msra.mxu0 %v63
    %541 = vmatprep.subr.mxu0 0.0
    %542 = vmatpush1.msra.mxu0 %v64
    %543 = vmatprep.subr.mxu0 0.0
    %544 = vmatpush1.msra.mxu0 %v65
    %545 = vmatprep.subr.mxu0 0.0
    %546 = vmatpush1.msra.mxu0 %v66
    %547 = vmatprep.subr.mxu0 0.0
    %548 = vmatpush1.msra.mxu0 %v67
    %549 = vmatprep.subr.mxu0 0.0
    %550 = vmatpush1.msra.mxu0 %v68
    %551 = vmatprep.subr.mxu0 0.0
    %552 = vmatpush1.msra.mxu0 %v69
    %553 = vmatprep.subr.mxu0 0.0
    %554 = vmatpush1.msra.mxu0 %v70
    %555 = vmatprep.subr.mxu0 0.0
    %556 = vmatpush1.msra.mxu0 %v71
    %557 = vmatprep.subr.mxu0 0.0
    %558 = vmatpush1.msra.mxu0 %v72
    %559 = vmatprep.subr.mxu0 0.0
    %560 = vmatpush1.msra.mxu0 %v73
    %561 = vmatprep.subr.mxu0 0.0
    %562 = vmatpush1.msra.mxu0 %v74
    %563 = vmatprep.subr.mxu0 0.0
    %564 = vmatpush1.msra.mxu0 %v75
    %565 = vmatprep.subr.mxu0 0.0
    %566 = vmatpush1.msra.mxu0 %v76
    %567 = vmatprep.subr.mxu0 0.0
    %568 = vmatpush1.msra.mxu0 %v77
    %569 = vmatprep.subr.mxu0 0.0
    %570 = vmatpush1.msra.mxu0 %v78
    %571 = vmatprep.subr.mxu0 0.0
    %572 = vmatpush1.msra.mxu0 0.0
    %573 = vmatprep.subr.mxu0 0.0
    %574 = vmatpush1.msra.mxu0 0.0
    %575 = vmatprep.subr.mxu0 0.0
    %576 = vmatpush1.msra.mxu0 0.0
    %577 = vmatprep.subr.mxu0 0.0
    %578 = vmatpush1.msra.mxu0 0.0
    %579 = vmatprep.subr.mxu0 0.0
    %580 = vmatpush1.msra.mxu0 0.0
    %581 = vmatprep.subr.mxu0 0.0
    %582 = vmatpush1.msra.mxu0 0.0
    %583 = vmatprep.subr.mxu0 0.0
    %584 = vmatpush1.msra.mxu0 0.0
    %585 = vmatprep.subr.mxu0 0.0
    %586 = vmatpush1.msra.mxu0 0.0
    %587 = vmatprep.subr.mxu0 0.0
    %588 = vmatpush1.msra.mxu0 0.0
    %589 = vmatprep.subr.mxu0 0.0
    %590 = vmatpush1.msra.mxu0 0.0
    %591 = vmatprep.subr.mxu0 0.0
    %592 = vmatpush1.msra.mxu0 0.0
    %593 = vmatprep.subr.mxu0 0.0
    %594 = vmatpush1.msra.mxu0 0.0
    %595 = vmatprep.subr.mxu0 0.0
    %596 = vmatpush1.msra.mxu0 0.0
    %597 = vmatprep.subr.mxu0 0.0
    %598 = vmatpush1.msra.mxu0 0.0
    %599 = vmatprep.subr.mxu0 0.0
    %600 = vmatpush1.msra.mxu0 0.0
    %601 = vmatprep.subr.mxu0 0.0
    %602 = vmatpush1.msra.mxu0 0.0
    %603 = vmatprep.mubr.f32.mxu0 0.0
    %604 = vmatmul.mubr.f32.gmra.mrb[0].mxu0 %v538
    %v605 = vpop.f32.mrb[0].mxu0
    %v606 = vadd.f32 0.0, %v605
    %v607 = vpop.f32.mrb[0].mxu0
    %608 = vdwg.mxu0
    %v609 = vmul.f32 %v59, %v61
    %v610 = vmul.f32 %v60, %v62
    %v611 = vmul.f32 %v609, 0.0010283804
    %v612 = vmul.f32 %v609, 0.0075987587
    %v614 = vrot.slane %v612, 1
    %v616 = vadd.f32 %v611, %v614
    %v617 = vmul.f32 %v609, 0.036000773
    %v619 = vrot.slane %v617, 2
    %v621 = vadd.f32 %v616, %v619
    %v622 = vmul.f32 %v609, 0.1093607
    %v623 = vmul.f32 %v610, 0.1093607
    %v626 = vrot.slane %v622, 3
    %v627 = vrot.slane %v623, 3
    %v628 = vsel %vm95, %v626, %v627
    %v630 = vadd.f32 %v621, %v628
    %v631 = vmul.f32 %v609, 0.21300554
    %v632 = vmul.f32 %v610, 0.21300554
    %v635 = vrot.slane %v631, 4
    %v636 = vrot.slane %v632, 4
    %v637 = vsel %vm105, %v635, %v636
    %v639 = vadd.f32 %v630, %v637
    %v640 = vmul.f32 %v609, 0.26601174
    %v641 = vmul.f32 %v610, 0.26601174
    %v644 = vrot.slane %v640, 5
    %v645 = vrot.slane %v641, 5
    %v646 = vsel %vm115, %v644, %v645
    %v648 = vadd.f32 %v639, %v646
    %v649 = vrot.slane %v631, 6
    %v650 = vrot.slane %v632, 6
    %v651 = vsel %vm121, %v649, %v650
    %v653 = vadd.f32 %v648, %v651
    %v654 = vrot.slane %v622, 7
    %v655 = vrot.slane %v623, 7
    %v656 = vsel %vm127, %v654, %v655
    %v658 = vadd.f32 %v653, %v656
    %v659 = vmul.f32 %v610, 0.036000773
    %v660 = vadd.f32 %v658, %v659
    %v661 = vmul.f32 %v610, 0.0075987587
    %v663 = vrot.slane %v661, 1
    %v665 = vadd.f32 %v660, %v663
    %v666 = vmul.f32 %v610, 0.0010283804
    %v668 = vrot.slane %v666, 2
    %v670 = vadd.f32 %v665, %v668
    %671 = vmatprep.subr.mxu0 0.0
    %672 = vmatpush1.msra.mxu0 %v63
    %673 = vmatprep.subr.mxu0 0.0
    %674 = vmatpush1.msra.mxu0 %v64
    %675 = vmatprep.subr.mxu0 0.0
    %676 = vmatpush1.msra.mxu0 %v65
    %677 = vmatprep.subr.mxu0 0.0
    %678 = vmatpush1.msra.mxu0 %v66
    %679 = vmatprep.subr.mxu0 0.0
    %680 = vmatpush1.msra.mxu0 %v67
    %681 = vmatprep.subr.mxu0 0.0
    %682 = vmatpush1.msra.mxu0 %v68
    %683 = vmatprep.subr.mxu0 0.0
    %684 = vmatpush1.msra.mxu0 %v69
    %685 = vmatprep.subr.mxu0 0.0
    %686 = vmatpush1.msra.mxu0 %v70
    %687 = vmatprep.subr.mxu0 0.0
    %688 = vmatpush1.msra.mxu0 %v71
    %689 = vmatprep.subr.mxu0 0.0
    %690 = vmatpush1.msra.mxu0 %v72
    %691 = vmatprep.subr.mxu0 0.0
    %692 = vmatpush1.msra.mxu0 %v73
    %693 = vmatprep.subr.mxu0 0.0
    %694 = vmatpush1.msra.mxu0 %v74
    %695 = vmatprep.subr.mxu0 0.0
    %696 = vmatpush1.msra.mxu0 %v75
    %697 = vmatprep.subr.mxu0 0.0
    %698 = vmatpush1.msra.mxu0 %v76
    %699 = vmatprep.subr.mxu0 0.0
    %700 = vmatpush1.msra.mxu0 %v77
    %701 = vmatprep.subr.mxu0 0.0
    %702 = vmatpush1.msra.mxu0 %v78
    %703 = vmatprep.subr.mxu0 0.0
    %704 = vmatpush1.msra.mxu0 0.0
    %705 = vmatprep.subr.mxu0 0.0
    %706 = vmatpush1.msra.mxu0 0.0
    %707 = vmatprep.subr.mxu0 0.0
    %708 = vmatpush1.msra.mxu0 0.0
    %709 = vmatprep.subr.mxu0 0.0
    %710 = vmatpush1.msra.mxu0 0.0
    %711 = vmatprep.subr.mxu0 0.0
    %712 = vmatpush1.msra.mxu0 0.0
    %713 = vmatprep.subr.mxu0 0.0
    %714 = vmatpush1.msra.mxu0 0.0
    %715 = vmatprep.subr.mxu0 0.0
    %716 = vmatpush1.msra.mxu0 0.0
    %717 = vmatprep.subr.mxu0 0.0
    %718 = vmatpush1.msra.mxu0 0.0
    %719 = vmatprep.subr.mxu0 0.0
    %720 = vmatpush1.msra.mxu0 0.0
    %721 = vmatprep.subr.mxu0 0.0
    %722 = vmatpush1.msra.mxu0 0.0
    %723 = vmatprep.subr.mxu0 0.0
    %724 = vmatpush1.msra.mxu0 0.0
    %725 = vmatprep.subr.mxu0 0.0
    %726 = vmatpush1.msra.mxu0 0.0
    %727 = vmatprep.subr.mxu0 0.0
    %728 = vmatpush1.msra.mxu0 0.0
    %729 = vmatprep.subr.mxu0 0.0
    %730 = vmatpush1.msra.mxu0 0.0
    %731 = vmatprep.subr.mxu0 0.0
    %732 = vmatpush1.msra.mxu0 0.0
    %733 = vmatprep.subr.mxu0 0.0
    %734 = vmatpush1.msra.mxu0 0.0
    %735 = vmatprep.mubr.f32.mxu0 0.0
    %736 = vmatmul.mubr.f32.gmra.mrb[0].mxu0 %v670
    %v737 = vpop.f32.mrb[0].mxu0
    %v738 = vadd.f32 0.0, %v737
    %v739 = vpop.f32.mrb[0].mxu0
    %740 = vdwg.mxu0
    %v741 = vmul.f32 %v212, %v212
    %v742 = vmul.f32 %v342, %v342
    %v743 = vmul.f32 %v212, %v342
    %v744 = vsub.f32 %v474, %v741
    %v745 = vsub.f32 %v606, %v742
    %v746 = vsub.f32 %v738, %v743
    %v747 = vmul.f32 %v743, 2.0
    %v748 = vadd.f32 %v747, 6.5025
    %v749 = vmul.f32 %v746, 2.0
    %v750 = vadd.f32 %v749, 58.5225
    %v751 = vmul.f32 %v748, %v750
    %v752 = vadd.f32 %v741, %v742
    %v753 = vadd.f32 %v752, 6.5025
    %v754 = vadd.f32 %v744, %v745
    %v755 = vadd.f32 %v754, 58.5225
    %v756 = vmul.f32 %v753, %v755
    %v757 = vrcp.pop %v756
    %v758 = vmul.f32 %v756, %v757
    %v759 = vsub.f32 2.0, %v758
    %v760 = vmul.f32 %v757, %v759
    %v761 = vmul.f32 %v751, %v760
    %v762 = vmul.f32 %v79, %v761
    %vm763 = vcmask 1045504
    %v764 = vsel %vm763, %v762, 0.0
    %v765 = vrot.slane %v764, 4
    %v766 = vadd.f32 %v764, %v765
    %v767 = vrot.slane %v766, 2
    %v768 = vadd.f32 %v766, %v767
    %v769 = vrot.slane %v768, 1
    %v770 = vadd.f32 %v768, %v769
    %771 = vst [vmem:[#allocation8] sm:$0x1] %v770
    // Predicated region
    $region30: #{tpu_custom_call.1} parent=1 // pred_check
      _
    $region31: #{tpu_custom_call.1} parent=1 // pred_check_branch
      %773 = sbr.rel (0) target = $region33
    $region32: #{tpu_custom_call.1} parent=1 // pred_region
      %s775 = ssub.s32 16, 16
      %776 = vsyncadd [#allocation4], %s775
      %s778 = sshll.u32 [#allocation8], 4
      %s779 = int_to_ptr.vmem [resolvable:$true] %s778
      %781 = dma.vmem_to_hbm [thread:$0]  %s779, 16, %s4, [#allocation4]
    $region33: #{tpu_custom_call.1} parent=1 // pred_fallthru
      _
    // Predicated region
    $region34: #{tpu_custom_call.1} parent=1 // pred_check
      _
    $region35: #{tpu_custom_call.1} parent=1 // pred_check_branch
      %783 = sbr.rel (0) target = $region37
    $region36: #{tpu_custom_call.1} parent=1 // pred_region
      %784 = dma.done [#allocation4], 16
    $region37: #{tpu_custom_call.1} parent=1 // pred_fallthru
      _
    %785 = vsyncpa [#allocation3], 1
    %786 = vsyncpa [#allocation6], 1
    %787 = vsyncpa [#allocation4], 1

// kernel: tpu_custom_call.1
$region0: #{tpu_custom_call.1}
  #allocation0 [shape = 'u32[]', space=smem, size = 0x4, offset = 0x4, fixed_abs, tag = 'smem constant byte address 0x4 - core index']
  #allocation1 [shape = 'u32[144,128]{1,0:T(1,128)}', space=vmem, size = 0x12000, scoped, tag = 'internal scratch']
  %s0 = inlined_call_operand.hbm [shape: f32[16,128], index: 0, kind: input, shape index: {}]
  %s1 = inlined_call_operand.hbm [shape: f32[16,128], index: 1, kind: input, shape index: {}]
  %s2 = inlined_call_operand.hbm [shape: f32[128,128], index: 2, kind: input, shape index: {}]
  %s3 = inlined_call_operand.vmem [shape: f32[6,128], index: 3, kind: input, shape index: {}]
  %s4 = inlined_call_operand.hbm [shape: f32[1,1,128], index: 4, kind: output, shape index: {}]
  %s5 = sld [smem:[#allocation0]]
  $region38: #{tpu_custom_call.1} parent=0
    _
  %s7 = ssub.s32 1, %s5
  %s8 = scalar_select 0, %s7, %s5
  $region1: #{tpu_custom_call.1} parent=0
    #allocation2 [shape = 'u8[8192]{0}', space=vmem, size = 0x2000, scoped, tag = 'input window, operand 0, single buffered']
    #allocation3 [shape = 's32[1]{0}', space=sflag, size = 0x4, scoped, tag = 'scoped memory for tpu_custom_call.1']
    #allocation4 [shape = 's32[1]{0}', space=sflag, size = 0x4, scoped, tag = 'scoped memory for tpu_custom_call.1']
    #allocation5 [shape = 'u8[8192]{0}', space=vmem, size = 0x2000, scoped, tag = 'input window, operand 1, single buffered']
    #allocation6 [shape = 's32[1]{0}', space=sflag, size = 0x4, scoped, tag = 'scoped memory for tpu_custom_call.1']
    #allocation7 [shape = 'u8[65536]{0}', space=vmem, size = 0x10000, scoped, tag = 'input window, operand 2, single buffered']
    #allocation8 [shape = 'u8[512]{0}', space=vmem, size = 0x400, scoped, tag = 'output window, operand 0, single buffered']
    %9 = vsyncpa [#allocation3], 0
    %10 = vsyncpa [#allocation6], 0
    %11 = vsyncpa [#allocation4], 0
    // Predicated region
    $region2: #{tpu_custom_call.1} parent=1 // pred_check
      _
    $region3: #{tpu_custom_call.1} parent=1 // pred_check_branch
      %13 = sbr.rel (0) target = $region5
    $region4: #{tpu_custom_call.1} parent=1 // pred_region
      %s15 = ssub.s32 256, 256
      %16 = vsyncadd [#allocation3], %s15
      %s17 = sshll.u32 [#allocation2], 4
      %s18 = int_to_ptr.vmem [resolvable:$true] %s17
      %23 = dma.hbm_to_vmem [thread:$0]  %s0, 256, %s18, [#allocation3], 128, 128, 8
    $region5: #{tpu_custom_call.1} parent=1 // pred_fallthru
      _
    // Predicated region
    $region6: #{tpu_custom_call.1} parent=1 // pred_check
      _
    $region7: #{tpu_custom_call.1} parent=1 // pred_check_branch
      %25 = sbr.rel (0) target = $region9
    $region8: #{tpu_custom_call.1} parent=1 // pred_region
      %s27 = ssub.s32 256, 256
      %28 = vsyncadd [#allocation6], %s27
      %s29 = sshll.u32 [#allocation5], 4
      %s30 = int_to_ptr.vmem [resolvable:$true] %s29
      %35 = dma.hbm_to_vmem [thread:$0]  %s1, 256, %s30, [#allocation6], 128, 128, 8
    $region9: #{tpu_custom_call.1} parent=1 // pred_fallthru
      _
    // Predicated region
    $region10: #{tpu_custom_call.1} parent=1 // pred_check
      _
    $region11: #{tpu_custom_call.1} parent=1 // pred_check_branch
      %37 = sbr.rel (0) target = $region13
    $region12: #{tpu_custom_call.1} parent=1 // pred_region
      %s39 = ssub.s32 2048, 2048
      %40 = vsyncadd [#allocation6], %s39
      %s41 = sshll.u32 [#allocation7], 4
      %s42 = int_to_ptr.vmem [resolvable:$true] %s41
      %47 = dma.hbm_to_vmem [thread:$0]  %s2, 2048, %s42, [#allocation6], 128, 128, 8
    $region13: #{tpu_custom_call.1} parent=1 // pred_fallthru
      _
    // Predicated region
    $region14: #{tpu_custom_call.1} parent=1 // pred_check
      _
    $region15: #{tpu_custom_call.1} parent=1 // pred_check_branch
      %49 = sbr.rel (0) target = $region17
    $region16: #{tpu_custom_call.1} parent=1 // pred_region
      _
    $region17: #{tpu_custom_call.1} parent=1 // pred_fallthru
      _
    // Predicated region
    $region18: #{tpu_custom_call.1} parent=1 // pred_check
      _
    $region19: #{tpu_custom_call.1} parent=1 // pred_check_branch
      %51 = sbr.rel (0) target = $region21
    $region20: #{tpu_custom_call.1} parent=1 // pred_region
      %52 = dma.done [#allocation3], 256
    $region21: #{tpu_custom_call.1} parent=1 // pred_fallthru
      _
    // Predicated region
    $region22: #{tpu_custom_call.1} parent=1 // pred_check
      _
    $region23: #{tpu_custom_call.1} parent=1 // pred_check_branch
      %54 = sbr.rel (0) target = $region25
    $region24: #{tpu_custom_call.1} parent=1 // pred_region
      %55 = dma.done [#allocation6], 256
    $region25: #{tpu_custom_call.1} parent=1 // pred_fallthru
      _
    // Predicated region
    $region26: #{tpu_custom_call.1} parent=1 // pred_check
      _
    $region27: #{tpu_custom_call.1} parent=1 // pred_check_branch
      %57 = sbr.rel (0) target = $region29
    $region28: #{tpu_custom_call.1} parent=1 // pred_region
      %58 = dma.done [#allocation6], 2048
    $region29: #{tpu_custom_call.1} parent=1 // pred_fallthru
      _
    %v59 = vld [vmem:[#allocation2] sm:$0xff]
    %v60 = vld [vmem:[#allocation2 + $0x8] sm:$0xff]
    %v61 = vld [vmem:[#allocation5] sm:$0xff]
    %v62 = vld [vmem:[#allocation5 + $0x8] sm:$0xff]
    %v63 = vld [vmem:[#allocation7] sm:$0xff]
    %v64 = vld [vmem:[#allocation7 + $0x8] sm:$0xff]
    %v65 = vld [vmem:[#allocation7 + $0x10] sm:$0xff]
    %v66 = vld [vmem:[#allocation7 + $0x18] sm:$0xff]
    %v67 = vld [vmem:[#allocation7 + $0x20] sm:$0xff]
    %v68 = vld [vmem:[#allocation7 + $0x28] sm:$0xff]
    %v69 = vld [vmem:[#allocation7 + $0x30] sm:$0xff]
    %v70 = vld [vmem:[#allocation7 + $0x38] sm:$0xff]
    %v71 = vld [vmem:[#allocation7 + $0x40] sm:$0xff]
    %v72 = vld [vmem:[#allocation7 + $0x48] sm:$0xff]
    %v73 = vld [vmem:[#allocation7 + $0x50] sm:$0xff]
    %v74 = vld [vmem:[#allocation7 + $0x58] sm:$0xff]
    %v75 = vld [vmem:[#allocation7 + $0x60] sm:$0xff]
    %v76 = vld [vmem:[#allocation7 + $0x68] sm:$0xff]
    %v77 = vld [vmem:[#allocation7 + $0x70] sm:$0xff]
    %v78 = vld [vmem:[#allocation7 + $0x78] sm:$0xff]
    %v79 = vld [vmem:[%s3] sm:$0x3f]
    %v80 = vmul.f32 %v59, 0.0010283804
    %v81 = vmul.f32 %v59, 0.0075987587
    %v83 = vrot.slane %v81, 1
    %v85 = vadd.f32 %v80, %v83
    %v86 = vmul.f32 %v59, 0.036000773
    %v88 = vrot.slane %v86, 2
    %v90 = vadd.f32 %v85, %v88
    %v91 = vmul.f32 %v59, 0.1093607
    %v92 = vmul.f32 %v60, 0.1093607
    %vm95 = vcmask 1044480
    %v96 = vrot.slane %v91, 3
    %v97 = vrot.slane %v92, 3
    %v98 = vsel %vm95, %v96, %v97
    %v100 = vadd.f32 %v90, %v98
    %v101 = vmul.f32 %v59, 0.21300554
    %v102 = vmul.f32 %v60, 0.21300554
    %vm105 = vcmask 1043456
    %v106 = vrot.slane %v101, 4
    %v107 = vrot.slane %v102, 4
    %v108 = vsel %vm105, %v106, %v107
    %v110 = vadd.f32 %v100, %v108
    %v111 = vmul.f32 %v59, 0.26601174
    %v112 = vmul.f32 %v60, 0.26601174
    %vm115 = vcmask 1042432
    %v116 = vrot.slane %v111, 5
    %v117 = vrot.slane %v112, 5
    %v118 = vsel %vm115, %v116, %v117
    %v120 = vadd.f32 %v110, %v118
    %vm121 = vcmask 1041408
    %v122 = vrot.slane %v101, 6
    %v123 = vrot.slane %v102, 6
    %v124 = vsel %vm121, %v122, %v123
    %v126 = vadd.f32 %v120, %v124
    %vm127 = vcmask 1040384
    %v128 = vrot.slane %v91, 7
    %v129 = vrot.slane %v92, 7
    %v130 = vsel %vm127, %v128, %v129
    %v132 = vadd.f32 %v126, %v130
    %v133 = vmul.f32 %v60, 0.036000773
    %v134 = vadd.f32 %v132, %v133
    %v135 = vmul.f32 %v60, 0.0075987587
    %v137 = vrot.slane %v135, 1
    %v139 = vadd.f32 %v134, %v137
    %v140 = vmul.f32 %v60, 0.0010283804
    %v142 = vrot.slane %v140, 2
    %v144 = vadd.f32 %v139, %v142
    %145 = vmatprep.subr.mxu0 0.0
    %146 = vmatpush1.msra.mxu0 %v63
    %147 = vmatprep.subr.mxu0 0.0
    %148 = vmatpush1.msra.mxu0 %v64
    %149 = vmatprep.subr.mxu0 0.0
    %150 = vmatpush1.msra.mxu0 %v65
    %151 = vmatprep.subr.mxu0 0.0
    %152 = vmatpush1.msra.mxu0 %v66
    %153 = vmatprep.subr.mxu0 0.0
    %154 = vmatpush1.msra.mxu0 %v67
    %155 = vmatprep.subr.mxu0 0.0
    %156 = vmatpush1.msra.mxu0 %v68
    %157 = vmatprep.subr.mxu0 0.0
    %158 = vmatpush1.msra.mxu0 %v69
    %159 = vmatprep.subr.mxu0 0.0
    %160 = vmatpush1.msra.mxu0 %v70
    %161 = vmatprep.subr.mxu0 0.0
    %162 = vmatpush1.msra.mxu0 %v71
    %163 = vmatprep.subr.mxu0 0.0
    %164 = vmatpush1.msra.mxu0 %v72
    %165 = vmatprep.subr.mxu0 0.0
    %166 = vmatpush1.msra.mxu0 %v73
    %167 = vmatprep.subr.mxu0 0.0
    %168 = vmatpush1.msra.mxu0 %v74
    %169 = vmatprep.subr.mxu0 0.0
    %170 = vmatpush1.msra.mxu0 %v75
    %171 = vmatprep.subr.mxu0 0.0
    %172 = vmatpush1.msra.mxu0 %v76
    %173 = vmatprep.subr.mxu0 0.0
    %174 = vmatpush1.msra.mxu0 %v77
    %175 = vmatprep.subr.mxu0 0.0
    %176 = vmatpush1.msra.mxu0 %v78
    %177 = vmatprep.subr.mxu0 0.0
    %178 = vmatpush1.msra.mxu0 0.0
    %179 = vmatprep.subr.mxu0 0.0
    %180 = vmatpush1.msra.mxu0 0.0
    %181 = vmatprep.subr.mxu0 0.0
    %182 = vmatpush1.msra.mxu0 0.0
    %183 = vmatprep.subr.mxu0 0.0
    %184 = vmatpush1.msra.mxu0 0.0
    %185 = vmatprep.subr.mxu0 0.0
    %186 = vmatpush1.msra.mxu0 0.0
    %187 = vmatprep.subr.mxu0 0.0
    %188 = vmatpush1.msra.mxu0 0.0
    %189 = vmatprep.subr.mxu0 0.0
    %190 = vmatpush1.msra.mxu0 0.0
    %191 = vmatprep.subr.mxu0 0.0
    %192 = vmatpush1.msra.mxu0 0.0
    %193 = vmatprep.subr.mxu0 0.0
    %194 = vmatpush1.msra.mxu0 0.0
    %195 = vmatprep.subr.mxu0 0.0
    %196 = vmatpush1.msra.mxu0 0.0
    %197 = vmatprep.subr.mxu0 0.0
    %198 = vmatpush1.msra.mxu0 0.0
    %199 = vmatprep.subr.mxu0 0.0
    %200 = vmatpush1.msra.mxu0 0.0
    %201 = vmatprep.subr.mxu0 0.0
    %202 = vmatpush1.msra.mxu0 0.0
    %203 = vmatprep.subr.mxu0 0.0
    %204 = vmatpush1.msra.mxu0 0.0
    %205 = vmatprep.subr.mxu0 0.0
    %206 = vmatpush1.msra.mxu0 0.0
    %207 = vmatprep.subr.mxu0 0.0
    %208 = vmatpush1.msra.mxu0 0.0
    %209 = vmatprep.mubr.f32.mxu0 0.0
    %210 = vmatmul.mubr.f32.gmra.mrb[0].mxu0 %v144
    %v211 = vpop.f32.mrb[0].mxu0
    %v212 = vadd.f32 0.0, %v211
    %v213 = vpop.f32.mrb[0].mxu0
    %214 = vdwg.mxu0
    %v215 = vmul.f32 %v61, 0.0010283804
    %v216 = vmul.f32 %v61, 0.0075987587
    %v218 = vrot.slane %v216, 1
    %v220 = vadd.f32 %v215, %v218
    %v221 = vmul.f32 %v61, 0.036000773
    %v223 = vrot.slane %v221, 2
    %v225 = vadd.f32 %v220, %v223
    %v226 = vmul.f32 %v61, 0.1093607
    %v227 = vmul.f32 %v62, 0.1093607
    %v230 = vrot.slane %v226, 3
    %v231 = vrot.slane %v227, 3
    %v232 = vsel %vm95, %v230, %v231
    %v234 = vadd.f32 %v225, %v232
    %v235 = vmul.f32 %v61, 0.21300554
    %v236 = vmul.f32 %v62, 0.21300554
    %v239 = vrot.slane %v235, 4
    %v240 = vrot.slane %v236, 4
    %v241 = vsel %vm105, %v239, %v240
    %v243 = vadd.f32 %v234, %v241
    %v244 = vmul.f32 %v61, 0.26601174
    %v245 = vmul.f32 %v62, 0.26601174
    %v248 = vrot.slane %v244, 5
    %v249 = vrot.slane %v245, 5
    %v250 = vsel %vm115, %v248, %v249
    %v252 = vadd.f32 %v243, %v250
    %v253 = vrot.slane %v235, 6
    %v254 = vrot.slane %v236, 6
    %v255 = vsel %vm121, %v253, %v254
    %v257 = vadd.f32 %v252, %v255
    %v258 = vrot.slane %v226, 7
    %v259 = vrot.slane %v227, 7
    %v260 = vsel %vm127, %v258, %v259
    %v262 = vadd.f32 %v257, %v260
    %v263 = vmul.f32 %v62, 0.036000773
    %v264 = vadd.f32 %v262, %v263
    %v265 = vmul.f32 %v62, 0.0075987587
    %v267 = vrot.slane %v265, 1
    %v269 = vadd.f32 %v264, %v267
    %v270 = vmul.f32 %v62, 0.0010283804
    %v272 = vrot.slane %v270, 2
    %v274 = vadd.f32 %v269, %v272
    %275 = vmatprep.subr.mxu0 0.0
    %276 = vmatpush1.msra.mxu0 %v63
    %277 = vmatprep.subr.mxu0 0.0
    %278 = vmatpush1.msra.mxu0 %v64
    %279 = vmatprep.subr.mxu0 0.0
    %280 = vmatpush1.msra.mxu0 %v65
    %281 = vmatprep.subr.mxu0 0.0
    %282 = vmatpush1.msra.mxu0 %v66
    %283 = vmatprep.subr.mxu0 0.0
    %284 = vmatpush1.msra.mxu0 %v67
    %285 = vmatprep.subr.mxu0 0.0
    %286 = vmatpush1.msra.mxu0 %v68
    %287 = vmatprep.subr.mxu0 0.0
    %288 = vmatpush1.msra.mxu0 %v69
    %289 = vmatprep.subr.mxu0 0.0
    %290 = vmatpush1.msra.mxu0 %v70
    %291 = vmatprep.subr.mxu0 0.0
    %292 = vmatpush1.msra.mxu0 %v71
    %293 = vmatprep.subr.mxu0 0.0
    %294 = vmatpush1.msra.mxu0 %v72
    %295 = vmatprep.subr.mxu0 0.0
    %296 = vmatpush1.msra.mxu0 %v73
    %297 = vmatprep.subr.mxu0 0.0
    %298 = vmatpush1.msra.mxu0 %v74
    %299 = vmatprep.subr.mxu0 0.0
    %300 = vmatpush1.msra.mxu0 %v75
    %301 = vmatprep.subr.mxu0 0.0
    %302 = vmatpush1.msra.mxu0 %v76
    %303 = vmatprep.subr.mxu0 0.0
    %304 = vmatpush1.msra.mxu0 %v77
    %305 = vmatprep.subr.mxu0 0.0
    %306 = vmatpush1.msra.mxu0 %v78
    %307 = vmatprep.subr.mxu0 0.0
    %308 = vmatpush1.msra.mxu0 0.0
    %309 = vmatprep.subr.mxu0 0.0
    %310 = vmatpush1.msra.mxu0 0.0
    %311 = vmatprep.subr.mxu0 0.0
    %312 = vmatpush1.msra.mxu0 0.0
    %313 = vmatprep.subr.mxu0 0.0
    %314 = vmatpush1.msra.mxu0 0.0
    %315 = vmatprep.subr.mxu0 0.0
    %316 = vmatpush1.msra.mxu0 0.0
    %317 = vmatprep.subr.mxu0 0.0
    %318 = vmatpush1.msra.mxu0 0.0
    %319 = vmatprep.subr.mxu0 0.0
    %320 = vmatpush1.msra.mxu0 0.0
    %321 = vmatprep.subr.mxu0 0.0
    %322 = vmatpush1.msra.mxu0 0.0
    %323 = vmatprep.subr.mxu0 0.0
    %324 = vmatpush1.msra.mxu0 0.0
    %325 = vmatprep.subr.mxu0 0.0
    %326 = vmatpush1.msra.mxu0 0.0
    %327 = vmatprep.subr.mxu0 0.0
    %328 = vmatpush1.msra.mxu0 0.0
    %329 = vmatprep.subr.mxu0 0.0
    %330 = vmatpush1.msra.mxu0 0.0
    %331 = vmatprep.subr.mxu0 0.0
    %332 = vmatpush1.msra.mxu0 0.0
    %333 = vmatprep.subr.mxu0 0.0
    %334 = vmatpush1.msra.mxu0 0.0
    %335 = vmatprep.subr.mxu0 0.0
    %336 = vmatpush1.msra.mxu0 0.0
    %337 = vmatprep.subr.mxu0 0.0
    %338 = vmatpush1.msra.mxu0 0.0
    %339 = vmatprep.mubr.f32.mxu0 0.0
    %340 = vmatmul.mubr.f32.gmra.mrb[0].mxu0 %v274
    %v341 = vpop.f32.mrb[0].mxu0
    %v342 = vadd.f32 0.0, %v341
    %v343 = vpop.f32.mrb[0].mxu0
    %344 = vdwg.mxu0
    %v345 = vmul.f32 %v59, %v59
    %v346 = vmul.f32 %v60, %v60
    %v347 = vmul.f32 %v345, 0.0010283804
    %v348 = vmul.f32 %v345, 0.0075987587
    %v350 = vrot.slane %v348, 1
    %v352 = vadd.f32 %v347, %v350
    %v353 = vmul.f32 %v345, 0.036000773
    %v355 = vrot.slane %v353, 2
    %v357 = vadd.f32 %v352, %v355
    %v358 = vmul.f32 %v345, 0.1093607
    %v359 = vmul.f32 %v346, 0.1093607
    %v362 = vrot.slane %v358, 3
    %v363 = vrot.slane %v359, 3
    %v364 = vsel %vm95, %v362, %v363
    %v366 = vadd.f32 %v357, %v364
    %v367 = vmul.f32 %v345, 0.21300554
    %v368 = vmul.f32 %v346, 0.21300554
    %v371 = vrot.slane %v367, 4
    %v372 = vrot.slane %v368, 4
    %v373 = vsel %vm105, %v371, %v372
    %v375 = vadd.f32 %v366, %v373
    %v376 = vmul.f32 %v345, 0.26601174
    %v377 = vmul.f32 %v346, 0.26601174
    %v380 = vrot.slane %v376, 5
    %v381 = vrot.slane %v377, 5
    %v382 = vsel %vm115, %v380, %v381
    %v384 = vadd.f32 %v375, %v382
    %v385 = vrot.slane %v367, 6
    %v386 = vrot.slane %v368, 6
    %v387 = vsel %vm121, %v385, %v386
    %v389 = vadd.f32 %v384, %v387
    %v390 = vrot.slane %v358, 7
    %v391 = vrot.slane %v359, 7
    %v392 = vsel %vm127, %v390, %v391
    %v394 = vadd.f32 %v389, %v392
    %v395 = vmul.f32 %v346, 0.036000773
    %v396 = vadd.f32 %v394, %v395
    %v397 = vmul.f32 %v346, 0.0075987587
    %v399 = vrot.slane %v397, 1
    %v401 = vadd.f32 %v396, %v399
    %v402 = vmul.f32 %v346, 0.0010283804
    %v404 = vrot.slane %v402, 2
    %v406 = vadd.f32 %v401, %v404
    %407 = vmatprep.subr.mxu0 0.0
    %408 = vmatpush1.msra.mxu0 %v63
    %409 = vmatprep.subr.mxu0 0.0
    %410 = vmatpush1.msra.mxu0 %v64
    %411 = vmatprep.subr.mxu0 0.0
    %412 = vmatpush1.msra.mxu0 %v65
    %413 = vmatprep.subr.mxu0 0.0
    %414 = vmatpush1.msra.mxu0 %v66
    %415 = vmatprep.subr.mxu0 0.0
    %416 = vmatpush1.msra.mxu0 %v67
    %417 = vmatprep.subr.mxu0 0.0
    %418 = vmatpush1.msra.mxu0 %v68
    %419 = vmatprep.subr.mxu0 0.0
    %420 = vmatpush1.msra.mxu0 %v69
    %421 = vmatprep.subr.mxu0 0.0
    %422 = vmatpush1.msra.mxu0 %v70
    %423 = vmatprep.subr.mxu0 0.0
    %424 = vmatpush1.msra.mxu0 %v71
    %425 = vmatprep.subr.mxu0 0.0
    %426 = vmatpush1.msra.mxu0 %v72
    %427 = vmatprep.subr.mxu0 0.0
    %428 = vmatpush1.msra.mxu0 %v73
    %429 = vmatprep.subr.mxu0 0.0
    %430 = vmatpush1.msra.mxu0 %v74
    %431 = vmatprep.subr.mxu0 0.0
    %432 = vmatpush1.msra.mxu0 %v75
    %433 = vmatprep.subr.mxu0 0.0
    %434 = vmatpush1.msra.mxu0 %v76
    %435 = vmatprep.subr.mxu0 0.0
    %436 = vmatpush1.msra.mxu0 %v77
    %437 = vmatprep.subr.mxu0 0.0
    %438 = vmatpush1.msra.mxu0 %v78
    %439 = vmatprep.subr.mxu0 0.0
    %440 = vmatpush1.msra.mxu0 0.0
    %441 = vmatprep.subr.mxu0 0.0
    %442 = vmatpush1.msra.mxu0 0.0
    %443 = vmatprep.subr.mxu0 0.0
    %444 = vmatpush1.msra.mxu0 0.0
    %445 = vmatprep.subr.mxu0 0.0
    %446 = vmatpush1.msra.mxu0 0.0
    %447 = vmatprep.subr.mxu0 0.0
    %448 = vmatpush1.msra.mxu0 0.0
    %449 = vmatprep.subr.mxu0 0.0
    %450 = vmatpush1.msra.mxu0 0.0
    %451 = vmatprep.subr.mxu0 0.0
    %452 = vmatpush1.msra.mxu0 0.0
    %453 = vmatprep.subr.mxu0 0.0
    %454 = vmatpush1.msra.mxu0 0.0
    %455 = vmatprep.subr.mxu0 0.0
    %456 = vmatpush1.msra.mxu0 0.0
    %457 = vmatprep.subr.mxu0 0.0
    %458 = vmatpush1.msra.mxu0 0.0
    %459 = vmatprep.subr.mxu0 0.0
    %460 = vmatpush1.msra.mxu0 0.0
    %461 = vmatprep.subr.mxu0 0.0
    %462 = vmatpush1.msra.mxu0 0.0
    %463 = vmatprep.subr.mxu0 0.0
    %464 = vmatpush1.msra.mxu0 0.0
    %465 = vmatprep.subr.mxu0 0.0
    %466 = vmatpush1.msra.mxu0 0.0
    %467 = vmatprep.subr.mxu0 0.0
    %468 = vmatpush1.msra.mxu0 0.0
    %469 = vmatprep.subr.mxu0 0.0
    %470 = vmatpush1.msra.mxu0 0.0
    %471 = vmatprep.mubr.f32.mxu0 0.0
    %472 = vmatmul.mubr.f32.gmra.mrb[0].mxu0 %v406
    %v473 = vpop.f32.mrb[0].mxu0
    %v474 = vadd.f32 0.0, %v473
    %v475 = vpop.f32.mrb[0].mxu0
    %476 = vdwg.mxu0
    %v477 = vmul.f32 %v61, %v61
    %v478 = vmul.f32 %v62, %v62
    %v479 = vmul.f32 %v477, 0.0010283804
    %v480 = vmul.f32 %v477, 0.0075987587
    %v482 = vrot.slane %v480, 1
    %v484 = vadd.f32 %v479, %v482
    %v485 = vmul.f32 %v477, 0.036000773
    %v487 = vrot.slane %v485, 2
    %v489 = vadd.f32 %v484, %v487
    %v490 = vmul.f32 %v477, 0.1093607
    %v491 = vmul.f32 %v478, 0.1093607
    %v494 = vrot.slane %v490, 3
    %v495 = vrot.slane %v491, 3
    %v496 = vsel %vm95, %v494, %v495
    %v498 = vadd.f32 %v489, %v496
    %v499 = vmul.f32 %v477, 0.21300554
    %v500 = vmul.f32 %v478, 0.21300554
    %v503 = vrot.slane %v499, 4
    %v504 = vrot.slane %v500, 4
    %v505 = vsel %vm105, %v503, %v504
    %v507 = vadd.f32 %v498, %v505
    %v508 = vmul.f32 %v477, 0.26601174
    %v509 = vmul.f32 %v478, 0.26601174
    %v512 = vrot.slane %v508, 5
    %v513 = vrot.slane %v509, 5
    %v514 = vsel %vm115, %v512, %v513
    %v516 = vadd.f32 %v507, %v514
    %v517 = vrot.slane %v499, 6
    %v518 = vrot.slane %v500, 6
    %v519 = vsel %vm121, %v517, %v518
    %v521 = vadd.f32 %v516, %v519
    %v522 = vrot.slane %v490, 7
    %v523 = vrot.slane %v491, 7
    %v524 = vsel %vm127, %v522, %v523
    %v526 = vadd.f32 %v521, %v524
    %v527 = vmul.f32 %v478, 0.036000773
    %v528 = vadd.f32 %v526, %v527
    %v529 = vmul.f32 %v478, 0.0075987587
    %v531 = vrot.slane %v529, 1
    %v533 = vadd.f32 %v528, %v531
    %v534 = vmul.f32 %v478, 0.0010283804
    %v536 = vrot.slane %v534, 2
    %v538 = vadd.f32 %v533, %v536
    %539 = vmatprep.subr.mxu0 0.0
    %540 = vmatpush1.msra.mxu0 %v63
    %541 = vmatprep.subr.mxu0 0.0
    %542 = vmatpush1.msra.mxu0 %v64
    %543 = vmatprep.subr.mxu0 0.0
    %544 = vmatpush1.msra.mxu0 %v65
    %545 = vmatprep.subr.mxu0 0.0
    %546 = vmatpush1.msra.mxu0 %v66
    %547 = vmatprep.subr.mxu0 0.0
    %548 = vmatpush1.msra.mxu0 %v67
    %549 = vmatprep.subr.mxu0 0.0
    %550 = vmatpush1.msra.mxu0 %v68
    %551 = vmatprep.subr.mxu0 0.0
    %552 = vmatpush1.msra.mxu0 %v69
    %553 = vmatprep.subr.mxu0 0.0
    %554 = vmatpush1.msra.mxu0 %v70
    %555 = vmatprep.subr.mxu0 0.0
    %556 = vmatpush1.msra.mxu0 %v71
    %557 = vmatprep.subr.mxu0 0.0
    %558 = vmatpush1.msra.mxu0 %v72
    %559 = vmatprep.subr.mxu0 0.0
    %560 = vmatpush1.msra.mxu0 %v73
    %561 = vmatprep.subr.mxu0 0.0
    %562 = vmatpush1.msra.mxu0 %v74
    %563 = vmatprep.subr.mxu0 0.0
    %564 = vmatpush1.msra.mxu0 %v75
    %565 = vmatprep.subr.mxu0 0.0
    %566 = vmatpush1.msra.mxu0 %v76
    %567 = vmatprep.subr.mxu0 0.0
    %568 = vmatpush1.msra.mxu0 %v77
    %569 = vmatprep.subr.mxu0 0.0
    %570 = vmatpush1.msra.mxu0 %v78
    %571 = vmatprep.subr.mxu0 0.0
    %572 = vmatpush1.msra.mxu0 0.0
    %573 = vmatprep.subr.mxu0 0.0
    %574 = vmatpush1.msra.mxu0 0.0
    %575 = vmatprep.subr.mxu0 0.0
    %576 = vmatpush1.msra.mxu0 0.0
    %577 = vmatprep.subr.mxu0 0.0
    %578 = vmatpush1.msra.mxu0 0.0
    %579 = vmatprep.subr.mxu0 0.0
    %580 = vmatpush1.msra.mxu0 0.0
    %581 = vmatprep.subr.mxu0 0.0
    %582 = vmatpush1.msra.mxu0 0.0
    %583 = vmatprep.subr.mxu0 0.0
    %584 = vmatpush1.msra.mxu0 0.0
    %585 = vmatprep.subr.mxu0 0.0
    %586 = vmatpush1.msra.mxu0 0.0
    %587 = vmatprep.subr.mxu0 0.0
    %588 = vmatpush1.msra.mxu0 0.0
    %589 = vmatprep.subr.mxu0 0.0
    %590 = vmatpush1.msra.mxu0 0.0
    %591 = vmatprep.subr.mxu0 0.0
    %592 = vmatpush1.msra.mxu0 0.0
    %593 = vmatprep.subr.mxu0 0.0
    %594 = vmatpush1.msra.mxu0 0.0
    %595 = vmatprep.subr.mxu0 0.0
    %596 = vmatpush1.msra.mxu0 0.0
    %597 = vmatprep.subr.mxu0 0.0
    %598 = vmatpush1.msra.mxu0 0.0
    %599 = vmatprep.subr.mxu0 0.0
    %600 = vmatpush1.msra.mxu0 0.0
    %601 = vmatprep.subr.mxu0 0.0
    %602 = vmatpush1.msra.mxu0 0.0
    %603 = vmatprep.mubr.f32.mxu0 0.0
    %604 = vmatmul.mubr.f32.gmra.mrb[0].mxu0 %v538
    %v605 = vpop.f32.mrb[0].mxu0
    %v606 = vadd.f32 0.0, %v605
    %v607 = vpop.f32.mrb[0].mxu0
    %608 = vdwg.mxu0
    %v609 = vmul.f32 %v59, %v61
    %v610 = vmul.f32 %v60, %v62
    %v611 = vmul.f32 %v609, 0.0010283804
    %v612 = vmul.f32 %v609, 0.0075987587
    %v614 = vrot.slane %v612, 1
    %v616 = vadd.f32 %v611, %v614
    %v617 = vmul.f32 %v609, 0.036000773
    %v619 = vrot.slane %v617, 2
    %v621 = vadd.f32 %v616, %v619
    %v622 = vmul.f32 %v609, 0.1093607
    %v623 = vmul.f32 %v610, 0.1093607
    %v626 = vrot.slane %v622, 3
    %v627 = vrot.slane %v623, 3
    %v628 = vsel %vm95, %v626, %v627
    %v630 = vadd.f32 %v621, %v628
    %v631 = vmul.f32 %v609, 0.21300554
    %v632 = vmul.f32 %v610, 0.21300554
    %v635 = vrot.slane %v631, 4
    %v636 = vrot.slane %v632, 4
    %v637 = vsel %vm105, %v635, %v636
    %v639 = vadd.f32 %v630, %v637
    %v640 = vmul.f32 %v609, 0.26601174
    %v641 = vmul.f32 %v610, 0.26601174
    %v644 = vrot.slane %v640, 5
    %v645 = vrot.slane %v641, 5
    %v646 = vsel %vm115, %v644, %v645
    %v648 = vadd.f32 %v639, %v646
    %v649 = vrot.slane %v631, 6
    %v650 = vrot.slane %v632, 6
    %v651 = vsel %vm121, %v649, %v650
    %v653 = vadd.f32 %v648, %v651
    %v654 = vrot.slane %v622, 7
    %v655 = vrot.slane %v623, 7
    %v656 = vsel %vm127, %v654, %v655
    %v658 = vadd.f32 %v653, %v656
    %v659 = vmul.f32 %v610, 0.036000773
    %v660 = vadd.f32 %v658, %v659
    %v661 = vmul.f32 %v610, 0.0075987587
    %v663 = vrot.slane %v661, 1
    %v665 = vadd.f32 %v660, %v663
    %v666 = vmul.f32 %v610, 0.0010283804
    %v668 = vrot.slane %v666, 2
    %v670 = vadd.f32 %v665, %v668
    %671 = vmatprep.subr.mxu0 0.0
    %672 = vmatpush1.msra.mxu0 %v63
    %673 = vmatprep.subr.mxu0 0.0
    %674 = vmatpush1.msra.mxu0 %v64
    %675 = vmatprep.subr.mxu0 0.0
    %676 = vmatpush1.msra.mxu0 %v65
    %677 = vmatprep.subr.mxu0 0.0
    %678 = vmatpush1.msra.mxu0 %v66
    %679 = vmatprep.subr.mxu0 0.0
    %680 = vmatpush1.msra.mxu0 %v67
    %681 = vmatprep.subr.mxu0 0.0
    %682 = vmatpush1.msra.mxu0 %v68
    %683 = vmatprep.subr.mxu0 0.0
    %684 = vmatpush1.msra.mxu0 %v69
    %685 = vmatprep.subr.mxu0 0.0
    %686 = vmatpush1.msra.mxu0 %v70
    %687 = vmatprep.subr.mxu0 0.0
    %688 = vmatpush1.msra.mxu0 %v71
    %689 = vmatprep.subr.mxu0 0.0
    %690 = vmatpush1.msra.mxu0 %v72
    %691 = vmatprep.subr.mxu0 0.0
    %692 = vmatpush1.msra.mxu0 %v73
    %693 = vmatprep.subr.mxu0 0.0
    %694 = vmatpush1.msra.mxu0 %v74
    %695 = vmatprep.subr.mxu0 0.0
    %696 = vmatpush1.msra.mxu0 %v75
    %697 = vmatprep.subr.mxu0 0.0
    %698 = vmatpush1.msra.mxu0 %v76
    %699 = vmatprep.subr.mxu0 0.0
    %700 = vmatpush1.msra.mxu0 %v77
    %701 = vmatprep.subr.mxu0 0.0
    %702 = vmatpush1.msra.mxu0 %v78
    %703 = vmatprep.subr.mxu0 0.0
    %704 = vmatpush1.msra.mxu0 0.0
    %705 = vmatprep.subr.mxu0 0.0
    %706 = vmatpush1.msra.mxu0 0.0
    %707 = vmatprep.subr.mxu0 0.0
    %708 = vmatpush1.msra.mxu0 0.0
    %709 = vmatprep.subr.mxu0 0.0
    %710 = vmatpush1.msra.mxu0 0.0
    %711 = vmatprep.subr.mxu0 0.0
    %712 = vmatpush1.msra.mxu0 0.0
    %713 = vmatprep.subr.mxu0 0.0
    %714 = vmatpush1.msra.mxu0 0.0
    %715 = vmatprep.subr.mxu0 0.0
    %716 = vmatpush1.msra.mxu0 0.0
    %717 = vmatprep.subr.mxu0 0.0
    %718 = vmatpush1.msra.mxu0 0.0
    %719 = vmatprep.subr.mxu0 0.0
    %720 = vmatpush1.msra.mxu0 0.0
    %721 = vmatprep.subr.mxu0 0.0
    %722 = vmatpush1.msra.mxu0 0.0
    %723 = vmatprep.subr.mxu0 0.0
    %724 = vmatpush1.msra.mxu0 0.0
    %725 = vmatprep.subr.mxu0 0.0
    %726 = vmatpush1.msra.mxu0 0.0
    %727 = vmatprep.subr.mxu0 0.0
    %728 = vmatpush1.msra.mxu0 0.0
    %729 = vmatprep.subr.mxu0 0.0
    %730 = vmatpush1.msra.mxu0 0.0
    %731 = vmatprep.subr.mxu0 0.0
    %732 = vmatpush1.msra.mxu0 0.0
    %733 = vmatprep.subr.mxu0 0.0
    %734 = vmatpush1.msra.mxu0 0.0
    %735 = vmatprep.mubr.f32.mxu0 0.0
    %736 = vmatmul.mubr.f32.gmra.mrb[0].mxu0 %v670
    %v737 = vpop.f32.mrb[0].mxu0
    %v738 = vadd.f32 0.0, %v737
    %v739 = vpop.f32.mrb[0].mxu0
    %740 = vdwg.mxu0
    %v741 = vmul.f32 %v212, %v212
    %v742 = vmul.f32 %v342, %v342
    %v743 = vmul.f32 %v212, %v342
    %v744 = vsub.f32 %v474, %v741
    %v745 = vsub.f32 %v606, %v742
    %v746 = vsub.f32 %v738, %v743
    %v747 = vmul.f32 %v743, 2.0
    %v748 = vadd.f32 %v747, 6.5025
    %v749 = vmul.f32 %v746, 2.0
    %v750 = vadd.f32 %v749, 58.5225
    %v751 = vmul.f32 %v748, %v750
    %v752 = vadd.f32 %v741, %v742
    %v753 = vadd.f32 %v752, 6.5025
    %v754 = vadd.f32 %v744, %v745
    %v755 = vadd.f32 %v754, 58.5225
    %v756 = vmul.f32 %v753, %v755
    %v757 = vrcp.pop %v756
    %v758 = vmul.f32 %v756, %v757
    %v759 = vsub.f32 2.0, %v758
    %v760 = vmul.f32 %v757, %v759
    %v761 = vmul.f32 %v751, %v760
    %v762 = vmul.f32 %v79, %v761
    %vm763 = vcmask 1045504
    %v764 = vsel %vm763, %v762, 0.0
    %v765 = vrot.slane %v764, 4
    %v766 = vadd.f32 %v764, %v765
    %v767 = vrot.slane %v766, 2
    %v768 = vadd.f32 %v766, %v767
    %v769 = vrot.slane %v768, 1
    %v770 = vadd.f32 %v768, %v769
    %771 = vst [vmem:[#allocation8] sm:$0x1] %v770
    // Predicated region
    $region30: #{tpu_custom_call.1} parent=1 // pred_check
      _
    $region31: #{tpu_custom_call.1} parent=1 // pred_check_branch
      %773 = sbr.rel (0) target = $region33
    $region32: #{tpu_custom_call.1} parent=1 // pred_region
      %s775 = ssub.s32 16, 16
      %776 = vsyncadd [#allocation4], %s775
      %s778 = sshll.u32 [#allocation8], 4
      %s779 = int_to_ptr.vmem [resolvable:$true] %s778
      %781 = dma.vmem_to_hbm [thread:$0]  %s779, 16, %s4, [#allocation4]
    $region33: #{tpu_custom_call.1} parent=1 // pred_fallthru
      _
    // Predicated region
    $region34: #{tpu_custom_call.1} parent=1 // pred_check
      _
    $region35: #{tpu_custom_call.1} parent=1 // pred_check_branch
      %783 = sbr.rel (0) target = $region37
    $region36: #{tpu_custom_call.1} parent=1 // pred_region
      %784 = dma.done [#allocation4], 16
    $region37: #{tpu_custom_call.1} parent=1 // pred_fallthru
      _
    %785 = vsyncpa [#allocation3], 1
    %786 = vsyncpa [#allocation6], 1
    %787 = vsyncpa [#allocation4], 1

</llo_original>
